<compile_context>
chip_gen: v7x
topology: tpu7x:2x2x1
jax: 0.10.0
libtpu: 0.0.40
codegen_flags: <defaults>
</compile_context>

<pallas_src>
import jax
import jax.numpy as jnp
from jax.experimental import pallas as pl
from jax.experimental.pallas import tpu as pltpu

EMB_SIZE = (2, 4, 8, 16, 64, 128)
EMB_SPLIT = (0, 2, 6, 14, 30, 94, 222)
SUM_EMB = sum(EMB_SIZE)                  # 222
MAX_EMB = max(EMB_SIZE)                  # 128
N_SPLIT = len(EMB_SIZE)                  # 6
K_SIDE = 256                             # per-side input width, 222 zero-padded to lane multiple
N_SIDE_COLS = N_SPLIT * MAX_EMB          # 768 branch columns per side
N_CHUNKS = 3                             # pipeline chunks per side
CHUNK_COLS = N_SIDE_COLS // N_CHUNKS     # 256 columns (= 2 groups of 128) per grid step
GROUPS_PER_CHUNK = CHUNK_COLS // MAX_EMB # 2
H_UM = 2 * MAX_EMB                       # 256
H1 = 512
OUT_PAD = 128                            # lane-dense padded output width
BN_EPS = 1e-5
WEIGHT_DTYPE = jnp.bfloat16              # weight slabs stored/shipped in bf16


def _bn_train(x, gamma, beta):
    # nn.BatchNorm1d in training mode: batch mean / biased variance, per feature column (f32).
    mean = jnp.mean(x, axis=0, keepdims=True)
    var = jnp.mean(jnp.square(x - mean), axis=0, keepdims=True)
    return (x - mean) * jax.lax.rsqrt(var + BN_EPS) * gamma + beta


def _mxu(a_f32, b_low):
    # bf16 operands (weights already bf16 from pack_params), f32 accumulation, single MXU pass.
    return jnp.dot(a_f32.astype(WEIGHT_DTYPE), b_low, preferred_element_type=jnp.float32)


def rs_mlp_kernel(x_ref, mixw_ref, wf_ref, bp_ref, w1_ref, hp_ref, w2_ref,
                  out_ref, acc_ref):
    side = pl.program_id(0)     # 0 = user, 1 = movie
    chunk = pl.program_id(1)    # 256-column chunk of this side's 768 branch columns

    @pl.when(jnp.logical_and(side == 0, chunk == 0))
    def _():
        acc_ref[...] = jnp.zeros_like(acc_ref)

    # ---- fused per-size stage for this chunk: matmul, BN, tanh, weighted group-reduce ----
    bp = bp_ref[...]                                    # (3, 256): bias / gamma / beta (f32)
    z = _mxu(x_ref[...], wf_ref[...]) + bp[0:1, :]      # (B, 256)
    y = jnp.tanh(_bn_train(z, bp[1:2, :], bp[2:3, :]))
    y = y * mixw_ref[...]                               # pre-expanded mixture weights (f32)

    partial = y[:, 0:MAX_EMB]                           # lane-aligned group reduce
    for g in range(1, GROUPS_PER_CHUNK):
        partial = partial + y[:, g * MAX_EMB:(g + 1) * MAX_EMB]

    @pl.when(side == 0)
    def _():
        acc_ref[0] = acc_ref[0] + partial

    @pl.when(side == 1)
    def _():
        acc_ref[1] = acc_ref[1] + partial

    # ---- head at the last grid step: BN(256) -> Linear(256,512) -> BN(512) -> Tanh -> Linear ----
    last = jnp.logical_and(side == pl.num_programs(0) - 1,
                           chunk == pl.num_programs(1) - 1)

    @pl.when(last)
    def _():
        hp = hp_ref[...]                                # (6, 512) packed head params (f32)
        vu = _bn_train(acc_ref[0], hp[0:1, 0:MAX_EMB], hp[1:2, 0:MAX_EMB])
        vm = _bn_train(acc_ref[1], hp[0:1, MAX_EMB:H_UM], hp[1:2, MAX_EMB:H_UM])
        # No (B,256) concat / scratch round-trip: two K=128 matmuls against the split w1.
        h = (_mxu(vu, w1_ref[0:MAX_EMB, :])
             + _mxu(vm, w1_ref[MAX_EMB:H_UM, :])
             + hp[2:3, :])                              # (B, 512)
        h = jnp.tanh(_bn_train(h, hp[3:4, :], hp[4:5, :]))
        out = _mxu(h, w2_ref[...]) + hp[5:6, 0:OUT_PAD]
        out_ref[...] = out.astype(out_ref.dtype)


def pack_params(p):
    """Build the fused / padded kernel-side parameter slabs once (wrapper-side, not per call)."""
    out_dim = p["w2"].shape[1]

    # Two dense-side staircase blocks (no cross-side zero half), stacked (2, 256, 768), bf16.
    wf = jnp.zeros((2, K_SIDE, N_SIDE_COLS), jnp.float32)
    for side, w_cat in enumerate((p["w_user"], p["w_movie"])):
        for i in range(N_SPLIT):
            lo, hi = EMB_SPLIT[i], EMB_SPLIT[i + 1]
            wf = wf.at[side, lo:hi, i * MAX_EMB:(i + 1) * MAX_EMB].set(w_cat[lo:hi, :])
    wf = wf.astype(WEIGHT_DTYPE)

    # Packed bias / tiled gamma / tiled beta for the fused branch BN+tanh stage (f32).
    bias = jnp.concatenate([p["b_user"].reshape(1, -1), p["b_movie"].reshape(1, -1)], axis=1)
    gamma = jnp.concatenate([jnp.tile(p["bn_user"][0:1, :], (1, N_SPLIT)),
                             jnp.tile(p["bn_movie"][0:1, :], (1, N_SPLIT))], axis=1)
    beta = jnp.concatenate([jnp.tile(p["bn_user"][1:2, :], (1, N_SPLIT)),
                            jnp.tile(p["bn_movie"][1:2, :], (1, N_SPLIT))], axis=1)
    branch_params = jnp.concatenate([bias, gamma, beta], axis=0)          # (3, 1536) f32

    # Packed head params: bn0 gamma/beta (256, padded), b1, bn1 gamma/beta, b2 (padded) (f32).
    def row(v, width=H1):
        v = jnp.asarray(v, jnp.float32).reshape(1, -1)
        return jnp.pad(v, ((0, 0), (0, width - v.shape[1])))

    head_params = jnp.concatenate([row(p["bn0"][0]), row(p["bn0"][1]),
                                   row(p["b1"]), row(p["bn1"][0]), row(p["bn1"][1]),
                                   row(p["b2"])], axis=0)                 # (6, 512) f32

    w1 = p["w1"].astype(WEIGHT_DTYPE)                                     # (256, 512) bf16
    w2 = jnp.zeros((H1, OUT_PAD), jnp.float32).at[:, :out_dim].set(p["w2"]).astype(WEIGHT_DTYPE)

    return dict(w_fused=wf, branch_params=branch_params, w1=w1,
                head_params=head_params, w2=w2, out_dim=out_dim)


def rs_mlp_forward(params, packed, u_weight, m_weight, user_id, movie_id):
    # Embedding gathers + cheap input packing are plain-JAX glue.
    uemb = params["emb_user"][user_id]                     # (B, 222)
    memb = params["emb_movie"][movie_id]                   # (B, 222)
    B = uemb.shape[0]

    x = jnp.zeros((2, B, K_SIDE), jnp.float32)
    x = x.at[0, :, :SUM_EMB].set(uemb).at[1, :, :SUM_EMB].set(memb)
    # (B, 12) mixture weights expanded once to the fused (B, 1536) column layout.
    mixw = jnp.repeat(jnp.concatenate([u_weight, m_weight], axis=1).astype(jnp.float32),
                      MAX_EMB, axis=1)

    inputs = (x, mixw, packed["w_fused"], packed["branch_params"],
              packed["w1"], packed["head_params"], packed["w2"])

    out = pl.pallas_call(
        rs_mlp_kernel,
        out_shape=jax.ShapeDtypeStruct((B, OUT_PAD), jnp.float32),
        grid=(2, N_CHUNKS),
        in_specs=[
            pl.BlockSpec((None, B, K_SIDE), lambda s, c: (s, 0, 0)),            # x, per side
            pl.BlockSpec((B, CHUNK_COLS), lambda s, c: (0, s * N_CHUNKS + c)),  # mix weights
            pl.BlockSpec((None, K_SIDE, CHUNK_COLS), lambda s, c: (s, 0, c)),   # fused weight
            pl.BlockSpec((3, CHUNK_COLS), lambda s, c: (0, s * N_CHUNKS + c)),  # bias/gamma/beta
            pl.BlockSpec((H_UM, H1), lambda s, c: (0, 0)),                      # w1
            pl.BlockSpec((6, H1), lambda s, c: (0, 0)),                         # head params
            pl.BlockSpec((H1, OUT_PAD), lambda s, c: (0, 0)),                   # w2 (padded)
        ],
        out_specs=pl.BlockSpec((B, OUT_PAD), lambda s, c: (0, 0)),
        scratch_shapes=[pltpu.VMEM((2, B, MAX_EMB), jnp.float32)],              # vu / vm acc
        compiler_params=pltpu.CompilerParams(
            dimension_semantics=("arbitrary", "arbitrary"),
            vmem_limit_bytes=32 * 1024 * 1024),
    )(*inputs)
    return out[:, :packed["out_dim"]]


def _ref_dot(a, b, quantize):
    if quantize:  # mirror the kernel's bf16 operand / f32 accumulation numerics
        a = a.astype(jnp.bfloat16).astype(jnp.float32)
        b = b.astype(jnp.bfloat16).astype(jnp.float32)
    return jnp.dot(a, b, preferred_element_type=jnp.float32)


def rs_mlp_reference(params, u_weight, m_weight, user_id, movie_id, quantize=False):
    """Pure-JAX reference with the original per-split semantics."""
    user_emb = params["emb_user"][user_id]
    movie_emb = params["emb_movie"][movie_id]

    def branch(emb, mix_w, w_cat, b_all, bn_params):
        acc = 0.0
        for i in range(N_SPLIT):
            lo, hi = EMB_SPLIT[i], EMB_SPLIT[i + 1]
            y = _ref_dot(emb[:, lo:hi], w_cat[lo:hi, :], quantize) + b_all[i:i + 1, :]
            y = jnp.tanh(_bn_train(y, bn_params[0:1, :], bn_params[1:2, :]))
            acc = acc + mix_w[:, i:i + 1] * y
        return acc

    v_user = branch(user_emb, u_weight, params["w_user"], params["b_user"], params["bn_user"])
    v_movie = branch(movie_emb, m_weight, params["w_movie"], params["b_movie"], params["bn_movie"])
    um = jnp.concatenate([v_user, v_movie], axis=1)
    h = _bn_train(um, params["bn0"][0:1, :], params["bn0"][1:2, :])
    h = _ref_dot(h, params["w1"], quantize) + params["b1"]
    h = jnp.tanh(_bn_train(h, params["bn1"][0:1, :], params["bn1"][1:2, :]))
    return _ref_dot(h, params["w2"], quantize) + params["b2"]


def init_params(key, user_num, movie_num, out_dim):
    ks = jax.random.split(key, 8)

    def linear(k, fan_in, fan_out):
        bound = 1.0 / (fan_in ** 0.5)
        kw, kb = jax.random.split(k)
        w = jax.random.uniform(kw, (fan_in, fan_out), jnp.float32, -bound, bound)
        b = jax.random.uniform(kb, (fan_out,), jnp.float32, -bound, bound)
        return w, b

    def split_linears(k):
        # nn.ModuleList([Linear(Emb_Size[i], 128)]): weights concatenated along fan-in
        # -> (222, 128); biases stacked -> (6, 128).
        ws, bs = [], []
        kk = jax.random.split(k, N_SPLIT)
        for i, d in enumerate(EMB_SIZE):
            w, b = linear(kk[i], d, MAX_EMB)
            ws.append(w)
            bs.append(b)
        return jnp.concatenate(ws, axis=0), jnp.stack(bs, axis=0)

    w_user, b_user = split_linears(ks[0])
    w_movie, b_movie = split_linears(ks[1])
    w1, b1 = linear(ks[2], H_UM, H1)
    w2, b2 = linear(ks[3], H1, out_dim)

    def bn(n):  # row 0 = gamma (ones), row 1 = beta (zeros)  (PyTorch defaults)
        return jnp.stack([jnp.ones((n,), jnp.float32), jnp.zeros((n,), jnp.float32)], axis=0)

    return dict(
        emb_user=jax.random.normal(ks[4], (user_num, SUM_EMB), jnp.float32),
        emb_movie=jax.random.normal(ks[5], (movie_num, SUM_EMB), jnp.float32),
        w_user=w_user, b_user=b_user,
        w_movie=w_movie, b_movie=b_movie,
        bn_user=bn(MAX_EMB), bn_movie=bn(MAX_EMB),
        bn0=bn(H_UM),
        w1=w1, b1=b1.reshape(1, H1),
        bn1=bn(H1),
        w2=w2, b2=b2.reshape(1, out_dim),
    )


if __name__ == "__main__":
    B = 16
    USER_NUM = 64
    MOVIE_NUM = 48
    OUT_DIM = 16

    key = jax.random.PRNGKey(0)
    kp, ku, km, kuw, kmw = jax.random.split(key, 5)

    params = init_params(kp, USER_NUM, MOVIE_NUM, OUT_DIM)
    packed = pack_params(params)                      # fused bf16 slabs built once
    user_id = jax.random.randint(ku, (B,), 0, USER_NUM)
    movie_id = jax.random.randint(km, (B,), 0, MOVIE_NUM)
    # mixture weights over the 6 candidate embedding sizes (one row per example)
    u_weight = jax.nn.softmax(jax.random.normal(kuw, (B, N_SPLIT), jnp.float32), axis=-1)
    m_weight = jax.nn.softmax(jax.random.normal(kmw, (B, N_SPLIT), jnp.float32), axis=-1)

    out = rs_mlp_forward(params, packed, u_weight, m_weight, user_id, movie_id)
    out = jax.block_until_ready(out)

    assert out.shape == (B, OUT_DIM), out.shape
    assert bool(jnp.all(jnp.isfinite(out)))

    # Tight structural parity against a reference that uses the same bf16-operand / f32-accum
    # matmul numerics (only accumulation order differs).
    ref_q = jax.block_until_ready(
        rs_mlp_reference(params, u_weight, m_weight, user_id, movie_id, quantize=True))
    err_q = float(jnp.max(jnp.abs(out - ref_q)))
    assert bool(jnp.allclose(out, ref_q, atol=5e-3, rtol=5e-3)), err_q

    # Loose sanity bound against the full-f32 reference (bf16 weight quantization effect).
    ref_f32 = jax.block_until_ready(
        rs_mlp_reference(params, u_weight, m_weight, user_id, movie_id, quantize=False))
    err_f32 = float(jnp.max(jnp.abs(out - ref_f32)))
    assert bool(jnp.allclose(out, ref_f32, atol=1e-1, rtol=1e-1)), err_f32

    print("KERNEL_OK")
</pallas_src>

<mosaic_0001>
module attributes {stable_mosaic.version = 11 : i64} {
  func.func @rs_mlp_kernel(%arg0: i32, %arg1: i32, %arg2: memref<1x16x256xf32, #tpu.memory_space<vmem>>, %arg3: memref<16x256xf32, #tpu.memory_space<vmem>>, %arg4: memref<1x256x256xbf16, #tpu.memory_space<vmem>>, %arg5: memref<3x256xf32, #tpu.memory_space<vmem>>, %arg6: memref<256x512xbf16, #tpu.memory_space<vmem>>, %arg7: memref<6x512xf32, #tpu.memory_space<vmem>>, %arg8: memref<512x128xbf16, #tpu.memory_space<vmem>>, %arg9: memref<16x128xf32, #tpu.memory_space<vmem>>, %arg10: memref<2x16x128xf32, #tpu.memory_space<vmem>>) attributes {dimension_semantics = [#tpu.dimension_semantics<arbitrary>, #tpu.dimension_semantics<arbitrary>], iteration_bounds = array<i64: 2, 3>, scalar_prefetch = 0 : i64, scratch_operands = 1 : i64, tpu.core_type = #tpu.core_type<tc>, window_params = [{transform_indices = @transform_0, window_bounds = array<i64: 1, 16, 256>}, {transform_indices = @transform_1, window_bounds = array<i64: 16, 256>}, {transform_indices = @transform_2, window_bounds = array<i64: 1, 256, 256>}, {transform_indices = @transform_3, window_bounds = array<i64: 3, 256>}, {pipeline_mode = #tpu.pipeline_mode<synchronous>, transform_indices = @transform_4, window_bounds = array<i64: 256, 512>}, {pipeline_mode = #tpu.pipeline_mode<synchronous>, transform_indices = @transform_5, window_bounds = array<i64: 6, 512>}, {pipeline_mode = #tpu.pipeline_mode<synchronous>, transform_indices = @transform_6, window_bounds = array<i64: 512, 128>}, {pipeline_mode = #tpu.pipeline_mode<synchronous>, transform_indices = @transform_7, window_bounds = array<i64: 16, 128>}]} {
    %c0_i32 = arith.constant 0 : i32
    %0 = arith.cmpi eq, %arg0, %c0_i32 : i32
    %c0_i32_0 = arith.constant 0 : i32
    %1 = arith.cmpi eq, %arg1, %c0_i32_0 : i32
    %2 = arith.andi %0, %1 : i1
    %3 = arith.extui %2 : i1 to i32
    %c0_i32_1 = arith.constant 0 : i32
    %4 = arith.cmpi ne, %3, %c0_i32_1 : i32
    scf.if %4 {
      %cst_21 = arith.constant 0.000000e+00 : f32
      %56 = vector.broadcast %cst_21 : f32 to vector<2x16x128xf32>
      %c0_22 = arith.constant 0 : index
      %c0_23 = arith.constant 0 : index
      %c0_24 = arith.constant 0 : index
      %57 = vector.load %arg10[%c0_22, %c0_23, %c0_24] : memref<2x16x128xf32, #tpu.memory_space<vmem>>, vector<2x16x128xf32>
      tpu.vector_store %arg10[%c0_22, %c0_23, %c0_24], %56 {strides = array<i32>} : memref<2x16x128xf32, #tpu.memory_space<vmem>>, vector<2x16x128xf32>,
    } else {
    }
    %c0 = arith.constant 0 : index
    %c0_2 = arith.constant 0 : index
    %5 = vector.load %arg5[%c0, %c0_2] : memref<3x256xf32, #tpu.memory_space<vmem>>, vector<3x256xf32>
    %c0_3 = arith.constant 0 : index
    %c0_4 = arith.constant 0 : index
    %c0_5 = arith.constant 0 : index
    %6 = vector.load %arg2[%c0_3, %c0_4, %c0_5] : memref<1x16x256xf32, #tpu.memory_space<vmem>>, vector<1x16x256xf32>
    %7 = vector.shape_cast %6 : vector<1x16x256xf32> to vector<16x256xf32>
    %c0_6 = arith.constant 0 : index
    %c0_7 = arith.constant 0 : index
    %c0_8 = arith.constant 0 : index
    %8 = vector.load %arg4[%c0_6, %c0_7, %c0_8] : memref<1x256x256xbf16, #tpu.memory_space<vmem>>, vector<1x256x256xbf16>
    %9 = vector.shape_cast %8 : vector<1x256x256xbf16> to vector<256x256xbf16>
    %10 = arith.truncf %7 : vector<16x256xf32> to vector<16x256xbf16>
    %cst = arith.constant dense<0.000000e+00> : vector<16x256xf32>
    %11 = tpu.matmul %10, %9, %cst {dimension_numbers = #tpu.dot_dimension_numbers<[1], [0], [0], [1], [0, 0, 1, 1], [], []>} : vector<16x256xbf16>, vector<256x256xbf16>, vector<16x256xf32> -> vector<16x256xf32>
    %12 = vector.extract_strided_slice %5 {offsets = [0, 0], sizes = [1, 256], strides = [1, 1]} : vector<3x256xf32> to vector<1x256xf32>
    %13 = vector.broadcast %12 : vector<1x256xf32> to vector<16x256xf32>
    %14 = arith.addf %11, %13 : vector<16x256xf32>
    %15 = vector.extract_strided_slice %5 {offsets = [1, 0], sizes = [1, 256], strides = [1, 1]} : vector<3x256xf32> to vector<1x256xf32>
    %16 = vector.extract_strided_slice %5 {offsets = [2, 0], sizes = [1, 256], strides = [1, 1]} : vector<3x256xf32> to vector<1x256xf32>
    %cst_9 = arith.constant dense<0.000000e+00> : vector<256xf32>
    %17 = vector.multi_reduction <add>, %14, %cst_9 [0] : vector<16x256xf32> to vector<256xf32>
    %18 = vector.shape_cast %17 : vector<256xf32> to vector<1x256xf32>
    %cst_10 = arith.constant 1.600000e+01 : f32
    %19 = vector.broadcast %cst_10 : f32 to vector<1x256xf32>
    %20 = arith.divf %18, %19 : vector<1x256xf32>
    %21 = vector.broadcast %20 : vector<1x256xf32> to vector<16x256xf32>
    %22 = arith.subf %14, %21 : vector<16x256xf32>
    %23 = arith.mulf %22, %22 : vector<16x256xf32>
    %cst_11 = arith.constant dense<0.000000e+00> : vector<256xf32>
    %24 = vector.multi_reduction <add>, %23, %cst_11 [0] : vector<16x256xf32> to vector<256xf32>
    %25 = vector.shape_cast %24 : vector<256xf32> to vector<1x256xf32>
    %cst_12 = arith.constant 1.600000e+01 : f32
    %26 = vector.broadcast %cst_12 : f32 to vector<1x256xf32>
    %27 = arith.divf %25, %26 : vector<1x256xf32>
    %28 = vector.broadcast %20 : vector<1x256xf32> to vector<16x256xf32>
    %29 = arith.subf %14, %28 : vector<16x256xf32>
    %cst_13 = arith.constant 9.99999974E-6 : f32
    %30 = vector.broadcast %cst_13 : f32 to vector<1x256xf32>
    %31 = arith.addf %27, %30 : vector<1x256xf32>
    %32 = math.rsqrt %31 : vector<1x256xf32>
    %33 = vector.broadcast %32 : vector<1x256xf32> to vector<16x256xf32>
    %34 = arith.mulf %29, %33 : vector<16x256xf32>
    %35 = vector.broadcast %15 : vector<1x256xf32> to vector<16x256xf32>
    %36 = arith.mulf %34, %35 : vector<16x256xf32>
    %37 = vector.broadcast %16 : vector<1x256xf32> to vector<16x256xf32>
    %38 = arith.addf %36, %37 : vector<16x256xf32>
    %39 = math.tanh %38 : vector<16x256xf32>
    %c0_14 = arith.constant 0 : index
    %c0_15 = arith.constant 0 : index
    %40 = vector.load %arg3[%c0_14, %c0_15] : memref<16x256xf32, #tpu.memory_space<vmem>>, vector<16x256xf32>
    %41 = arith.mulf %39, %40 : vector<16x256xf32>
    %42 = vector.extract_strided_slice %41 {offsets = [0, 0], sizes = [16, 128], strides = [1, 1]} : vector<16x256xf32> to vector<16x128xf32>
    %43 = vector.extract_strided_slice %41 {offsets = [0, 128], sizes = [16, 128], strides = [1, 1]} : vector<16x256xf32> to vector<16x128xf32>
    %44 = arith.addf %42, %43 : vector<16x128xf32>
    %c0_i32_16 = arith.constant 0 : i32
    %45 = arith.cmpi eq, %arg0, %c0_i32_16 : i32
    %46 = arith.extui %45 : i1 to i32
    %c0_i32_17 = arith.constant 0 : i32
    %47 = arith.cmpi ne, %46, %c0_i32_17 : i32
    scf.if %47 {
      %c0_21 = arith.constant 0 : index
      %c0_22 = arith.constant 0 : index
      %c0_23 = arith.constant 0 : index
      %56 = vector.load %arg10[%c0_21, %c0_22, %c0_23] : memref<2x16x128xf32, #tpu.memory_space<vmem>>, vector<1x16x128xf32>
      %57 = vector.shape_cast %56 : vector<1x16x128xf32> to vector<16x128xf32>
      %58 = arith.addf %57, %44 : vector<16x128xf32>
      %c0_24 = arith.constant 0 : index
      %c0_25 = arith.constant 0 : index
      %c0_26 = arith.constant 0 : index
      %59 = vector.load %arg10[%c0_24, %c0_25, %c0_26] : memref<2x16x128xf32, #tpu.memory_space<vmem>>, vector<1x16x128xf32>
      %60 = vector.shape_cast %59 : vector<1x16x128xf32> to vector<16x128xf32>
      %61 = vector.shape_cast %58 : vector<16x128xf32> to vector<1x16x128xf32>
      tpu.vector_store %arg10[%c0_24, %c0_25, %c0_26], %61 {strides = array<i32>} : memref<2x16x128xf32, #tpu.memory_space<vmem>>, vector<1x16x128xf32>,
    } else {
    }
    %c1_i32 = arith.constant 1 : i32
    %48 = arith.cmpi eq, %arg0, %c1_i32 : i32
    %49 = arith.extui %48 : i1 to i32
    %c0_i32_18 = arith.constant 0 : i32
    %50 = arith.cmpi ne, %49, %c0_i32_18 : i32
    scf.if %50 {
      %c1 = arith.constant 1 : index
      %c0_21 = arith.constant 0 : index
      %c0_22 = arith.constant 0 : index
      %56 = vector.load %arg10[%c1, %c0_21, %c0_22] : memref<2x16x128xf32, #tpu.memory_space<vmem>>, vector<1x16x128xf32>
      %57 = vector.shape_cast %56 : vector<1x16x128xf32> to vector<16x128xf32>
      %58 = arith.addf %57, %44 : vector<16x128xf32>
      %c1_23 = arith.constant 1 : index
      %c0_24 = arith.constant 0 : index
      %c0_25 = arith.constant 0 : index
      %59 = vector.load %arg10[%c1_23, %c0_24, %c0_25] : memref<2x16x128xf32, #tpu.memory_space<vmem>>, vector<1x16x128xf32>
      %60 = vector.shape_cast %59 : vector<1x16x128xf32> to vector<16x128xf32>
      %61 = vector.shape_cast %58 : vector<16x128xf32> to vector<1x16x128xf32>
      tpu.vector_store %arg10[%c1_23, %c0_24, %c0_25], %61 {strides = array<i32>} : memref<2x16x128xf32, #tpu.memory_space<vmem>>, vector<1x16x128xf32>,
    } else {
    }
    %c1_i32_19 = arith.constant 1 : i32
    %51 = arith.cmpi eq, %arg0, %c1_i32_19 : i32
    %c2_i32 = arith.constant 2 : i32
    %52 = arith.cmpi eq, %arg1, %c2_i32 : i32
    %53 = arith.andi %51, %52 : i1
    %54 = arith.extui %53 : i1 to i32
    %c0_i32_20 = arith.constant 0 : i32
    %55 = arith.cmpi ne, %54, %c0_i32_20 : i32
    scf.if %55 {
      %c0_21 = arith.constant 0 : index
      %c0_22 = arith.constant 0 : index
      %56 = vector.load %arg7[%c0_21, %c0_22] : memref<6x512xf32, #tpu.memory_space<vmem>>, vector<6x512xf32>
      %c0_23 = arith.constant 0 : index
      %c0_24 = arith.constant 0 : index
      %c0_25 = arith.constant 0 : index
      %57 = vector.load %arg10[%c0_23, %c0_24, %c0_25] : memref<2x16x128xf32, #tpu.memory_space<vmem>>, vector<1x16x128xf32>
      %58 = vector.shape_cast %57 : vector<1x16x128xf32> to vector<16x128xf32>
      %59 = vector.extract_strided_slice %56 {offsets = [0, 0], sizes = [1, 128], strides = [1, 1]} : vector<6x512xf32> to vector<1x128xf32>
      %60 = vector.extract_strided_slice %56 {offsets = [1, 0], sizes = [1, 128], strides = [1, 1]} : vector<6x512xf32> to vector<1x128xf32>
      %cst_26 = arith.constant dense<0.000000e+00> : vector<128xf32>
      %61 = vector.multi_reduction <add>, %58, %cst_26 [0] : vector<16x128xf32> to vector<128xf32>
      %62 = vector.shape_cast %61 : vector<128xf32> to vector<1x128xf32>
      %cst_27 = arith.constant 1.600000e+01 : f32
      %63 = vector.broadcast %cst_27 : f32 to vector<1x128xf32>
      %64 = arith.divf %62, %63 : vector<1x128xf32>
      %65 = vector.broadcast %64 : vector<1x128xf32> to vector<16x128xf32>
      %66 = arith.subf %58, %65 : vector<16x128xf32>
      %67 = arith.mulf %66, %66 : vector<16x128xf32>
      %cst_28 = arith.constant dense<0.000000e+00> : vector<128xf32>
      %68 = vector.multi_reduction <add>, %67, %cst_28 [0] : vector<16x128xf32> to vector<128xf32>
      %69 = vector.shape_cast %68 : vector<128xf32> to vector<1x128xf32>
      %cst_29 = arith.constant 1.600000e+01 : f32
      %70 = vector.broadcast %cst_29 : f32 to vector<1x128xf32>
      %71 = arith.divf %69, %70 : vector<1x128xf32>
      %72 = vector.broadcast %64 : vector<1x128xf32> to vector<16x128xf32>
      %73 = arith.subf %58, %72 : vector<16x128xf32>
      %cst_30 = arith.constant 9.99999974E-6 : f32
      %74 = vector.broadcast %cst_30 : f32 to vector<1x128xf32>
      %75 = arith.addf %71, %74 : vector<1x128xf32>
      %76 = math.rsqrt %75 : vector<1x128xf32>
      %77 = vector.broadcast %76 : vector<1x128xf32> to vector<16x128xf32>
      %78 = arith.mulf %73, %77 : vector<16x128xf32>
      %79 = vector.broadcast %59 : vector<1x128xf32> to vector<16x128xf32>
      %80 = arith.mulf %78, %79 : vector<16x128xf32>
      %81 = vector.broadcast %60 : vector<1x128xf32> to vector<16x128xf32>
      %82 = arith.addf %80, %81 : vector<16x128xf32>
      %c1 = arith.constant 1 : index
      %c0_31 = arith.constant 0 : index
      %c0_32 = arith.constant 0 : index
      %83 = vector.load %arg10[%c1, %c0_31, %c0_32] : memref<2x16x128xf32, #tpu.memory_space<vmem>>, vector<1x16x128xf32>
      %84 = vector.shape_cast %83 : vector<1x16x128xf32> to vector<16x128xf32>
      %85 = vector.extract_strided_slice %56 {offsets = [0, 128], sizes = [1, 128], strides = [1, 1]} : vector<6x512xf32> to vector<1x128xf32>
      %86 = vector.extract_strided_slice %56 {offsets = [1, 128], sizes = [1, 128], strides = [1, 1]} : vector<6x512xf32> to vector<1x128xf32>
      %cst_33 = arith.constant dense<0.000000e+00> : vector<128xf32>
      %87 = vector.multi_reduction <add>, %84, %cst_33 [0] : vector<16x128xf32> to vector<128xf32>
      %88 = vector.shape_cast %87 : vector<128xf32> to vector<1x128xf32>
      %cst_34 = arith.constant 1.600000e+01 : f32
      %89 = vector.broadcast %cst_34 : f32 to vector<1x128xf32>
      %90 = arith.divf %88, %89 : vector<1x128xf32>
      %91 = vector.broadcast %90 : vector<1x128xf32> to vector<16x128xf32>
      %92 = arith.subf %84, %91 : vector<16x128xf32>
      %93 = arith.mulf %92, %92 : vector<16x128xf32>
      %cst_35 = arith.constant dense<0.000000e+00> : vector<128xf32>
      %94 = vector.multi_reduction <add>, %93, %cst_35 [0] : vector<16x128xf32> to vector<128xf32>
      %95 = vector.shape_cast %94 : vector<128xf32> to vector<1x128xf32>
      %cst_36 = arith.constant 1.600000e+01 : f32
      %96 = vector.broadcast %cst_36 : f32 to vector<1x128xf32>
      %97 = arith.divf %95, %96 : vector<1x128xf32>
      %98 = vector.broadcast %90 : vector<1x128xf32> to vector<16x128xf32>
      %99 = arith.subf %84, %98 : vector<16x128xf32>
      %cst_37 = arith.constant 9.99999974E-6 : f32
      %100 = vector.broadcast %cst_37 : f32 to vector<1x128xf32>
      %101 = arith.addf %97, %100 : vector<1x128xf32>
      %102 = math.rsqrt %101 : vector<1x128xf32>
      %103 = vector.broadcast %102 : vector<1x128xf32> to vector<16x128xf32>
      %104 = arith.mulf %99, %103 : vector<16x128xf32>
      %105 = vector.broadcast %85 : vector<1x128xf32> to vector<16x128xf32>
      %106 = arith.mulf %104, %105 : vector<16x128xf32>
      %107 = vector.broadcast %86 : vector<1x128xf32> to vector<16x128xf32>
      %108 = arith.addf %106, %107 : vector<16x128xf32>
      %c0_38 = arith.constant 0 : index
      %c0_39 = arith.constant 0 : index
      %109 = vector.load %arg6[%c0_38, %c0_39] : memref<256x512xbf16, #tpu.memory_space<vmem>>, vector<128x512xbf16>
      %110 = arith.truncf %82 : vector<16x128xf32> to vector<16x128xbf16>
      %cst_40 = arith.constant dense<0.000000e+00> : vector<16x512xf32>
      %111 = tpu.matmul %110, %109, %cst_40 {dimension_numbers = #tpu.dot_dimension_numbers<[1], [0], [0], [1], [0, 0, 1, 1], [], []>} : vector<16x128xbf16>, vector<128x512xbf16>, vector<16x512xf32> -> vector<16x512xf32>
      %c128 = arith.constant 128 : index
      %c0_41 = arith.constant 0 : index
      %112 = vector.load %arg6[%c128, %c0_41] : memref<256x512xbf16, #tpu.memory_space<vmem>>, vector<128x512xbf16>
      %113 = arith.truncf %108 : vector<16x128xf32> to vector<16x128xbf16>
      %cst_42 = arith.constant dense<0.000000e+00> : vector<16x512xf32>
      %114 = tpu.matmul %113, %112, %cst_42 {dimension_numbers = #tpu.dot_dimension_numbers<[1], [0], [0], [1], [0, 0, 1, 1], [], []>} : vector<16x128xbf16>, vector<128x512xbf16>, vector<16x512xf32> -> vector<16x512xf32>
      %115 = arith.addf %111, %114 : vector<16x512xf32>
      %116 = vector.extract_strided_slice %56 {offsets = [2, 0], sizes = [1, 512], strides = [1, 1]} : vector<6x512xf32> to vector<1x512xf32>
      %117 = vector.broadcast %116 : vector<1x512xf32> to vector<16x512xf32>
      %118 = arith.addf %115, %117 : vector<16x512xf32>
      %119 = vector.extract_strided_slice %56 {offsets = [3, 0], sizes = [1, 512], strides = [1, 1]} : vector<6x512xf32> to vector<1x512xf32>
      %120 = vector.extract_strided_slice %56 {offsets = [4, 0], sizes = [1, 512], strides = [1, 1]} : vector<6x512xf32> to vector<1x512xf32>
      %cst_43 = arith.constant dense<0.000000e+00> : vector<512xf32>
      %121 = vector.multi_reduction <add>, %118, %cst_43 [0] : vector<16x512xf32> to vector<512xf32>
      %122 = vector.shape_cast %121 : vector<512xf32> to vector<1x512xf32>
      %cst_44 = arith.constant 1.600000e+01 : f32
      %123 = vector.broadcast %cst_44 : f32 to vector<1x512xf32>
      %124 = arith.divf %122, %123 : vector<1x512xf32>
      %125 = vector.broadcast %124 : vector<1x512xf32> to vector<16x512xf32>
      %126 = arith.subf %118, %125 : vector<16x512xf32>
      %127 = arith.mulf %126, %126 : vector<16x512xf32>
      %cst_45 = arith.constant dense<0.000000e+00> : vector<512xf32>
      %128 = vector.multi_reduction <add>, %127, %cst_45 [0] : vector<16x512xf32> to vector<512xf32>
      %129 = vector.shape_cast %128 : vector<512xf32> to vector<1x512xf32>
      %cst_46 = arith.constant 1.600000e+01 : f32
      %130 = vector.broadcast %cst_46 : f32 to vector<1x512xf32>
      %131 = arith.divf %129, %130 : vector<1x512xf32>
      %132 = vector.broadcast %124 : vector<1x512xf32> to vector<16x512xf32>
      %133 = arith.subf %118, %132 : vector<16x512xf32>
      %cst_47 = arith.constant 9.99999974E-6 : f32
      %134 = vector.broadcast %cst_47 : f32 to vector<1x512xf32>
      %135 = arith.addf %131, %134 : vector<1x512xf32>
      %136 = math.rsqrt %135 : vector<1x512xf32>
      %137 = vector.broadcast %136 : vector<1x512xf32> to vector<16x512xf32>
      %138 = arith.mulf %133, %137 : vector<16x512xf32>
      %139 = vector.broadcast %119 : vector<1x512xf32> to vector<16x512xf32>
      %140 = arith.mulf %138, %139 : vector<16x512xf32>
      %141 = vector.broadcast %120 : vector<1x512xf32> to vector<16x512xf32>
      %142 = arith.addf %140, %141 : vector<16x512xf32>
      %143 = math.tanh %142 : vector<16x512xf32>
      %c0_48 = arith.constant 0 : index
      %c0_49 = arith.constant 0 : index
      %144 = vector.load %arg8[%c0_48, %c0_49] : memref<512x128xbf16, #tpu.memory_space<vmem>>, vector<512x128xbf16>
      %145 = arith.truncf %143 : vector<16x512xf32> to vector<16x512xbf16>
      %cst_50 = arith.constant dense<0.000000e+00> : vector<16x128xf32>
      %146 = tpu.matmul %145, %144, %cst_50 {dimension_numbers = #tpu.dot_dimension_numbers<[1], [0], [0], [1], [0, 0, 1, 1], [], []>} : vector<16x512xbf16>, vector<512x128xbf16>, vector<16x128xf32> -> vector<16x128xf32>
      %147 = vector.extract_strided_slice %56 {offsets = [5, 0], sizes = [1, 128], strides = [1, 1]} : vector<6x512xf32> to vector<1x128xf32>
      %148 = vector.broadcast %147 : vector<1x128xf32> to vector<16x128xf32>
      %149 = arith.addf %146, %148 : vector<16x128xf32>
      %c0_51 = arith.constant 0 : index
      %c0_52 = arith.constant 0 : index
      %150 = vector.load %arg9[%c0_51, %c0_52] : memref<16x128xf32, #tpu.memory_space<vmem>>, vector<16x128xf32>
      tpu.vector_store %arg9[%c0_51, %c0_52], %149 {strides = array<i32>} : memref<16x128xf32, #tpu.memory_space<vmem>>, vector<16x128xf32>,
    } else {
    }
    return
  }
  func.func @transform_0(%arg0: i32, %arg1: i32) -> (i32, i32, i32) {
    %c0_i32 = arith.constant 0 : i32
    %c0_i32_0 = arith.constant 0 : i32
    %c0_i32_1 = arith.constant 0 : i32
    return %arg0, %c0_i32, %c0_i32_0 : i32, i32, i32
  }
  func.func @transform_1(%arg0: i32, %arg1: i32) -> (i32, i32) {
    %c3_i32 = arith.constant 3 : i32
    %0 = arith.muli %arg0, %c3_i32 : i32
    %1 = arith.addi %0, %arg1 : i32
    %c0_i32 = arith.constant 0 : i32
    %c0_i32_0 = arith.constant 0 : i32
    return %c0_i32, %1 : i32, i32
  }
  func.func @transform_2(%arg0: i32, %arg1: i32) -> (i32, i32, i32) {
    %c0_i32 = arith.constant 0 : i32
    %c0_i32_0 = arith.constant 0 : i32
    return %arg0, %c0_i32, %arg1 : i32, i32, i32
  }
  func.func @transform_3(%arg0: i32, %arg1: i32) -> (i32, i32) {
    %c3_i32 = arith.constant 3 : i32
    %0 = arith.muli %arg0, %c3_i32 : i32
    %1 = arith.addi %0, %arg1 : i32
    %c0_i32 = arith.constant 0 : i32
    %c0_i32_0 = arith.constant 0 : i32
    return %c0_i32, %1 : i32, i32
  }
  func.func @transform_4(%arg0: i32, %arg1: i32) -> (i32, i32) {
    %c0_i32 = arith.constant 0 : i32
    %c0_i32_0 = arith.constant 0 : i32
    %c0_i32_1 = arith.constant 0 : i32
    return %c0_i32, %c0_i32_0 : i32, i32
  }
  func.func @transform_5(%arg0: i32, %arg1: i32) -> (i32, i32) {
    %c0_i32 = arith.constant 0 : i32
    %c0_i32_0 = arith.constant 0 : i32
    %c0_i32_1 = arith.constant 0 : i32
    return %c0_i32, %c0_i32_0 : i32, i32
  }
  func.func @transform_6(%arg0: i32, %arg1: i32) -> (i32, i32) {
    %c0_i32 = arith.constant 0 : i32
    %c0_i32_0 = arith.constant 0 : i32
    %c0_i32_1 = arith.constant 0 : i32
    return %c0_i32, %c0_i32_0 : i32, i32
  }
  func.func @transform_7(%arg0: i32, %arg1: i32) -> (i32, i32) {
    %c0_i32 = arith.constant 0 : i32
    %c0_i32_0 = arith.constant 0 : i32
    %c0_i32_1 = arith.constant 0 : i32
    return %c0_i32, %c0_i32_0 : i32, i32
  }
}

</mosaic_0001>

<llo_original>
// kernel: tpu_custom_call.1
$region0: #{tpu_custom_call.1}
  #allocation0 [shape = 'u32[]', space=smem, size = 0x4, offset = 0x4, fixed_abs, tag = 'smem constant byte address 0x4 - core index']
  #allocation1 [shape = 'u32[144,128]{1,0:T(1,128)}', space=vmem, size = 0x12000, scoped, tag = 'internal scratch']
  #allocation2 [shape = 'f32[2,16,128]{2,1,0:T(8,128)}', space=vmem, size = 0x4000, scoped, tag = 'scratch operand']
  %s0 = inlined_call_operand.hbm [shape: f32[2,16,256], index: 0, kind: input, shape index: {}]
  %s1 = inlined_call_operand.hbm [shape: f32[16,1536], index: 1, kind: input, shape index: {}]
  %s2 = inlined_call_operand.hbm [shape: bf16[2,256,768], index: 2, kind: input, shape index: {}]
  %s3 = inlined_call_operand.hbm [shape: f32[3,1536], index: 3, kind: input, shape index: {}]
  %s4 = inlined_call_operand.hbm [shape: bf16[256,512], index: 4, kind: input, shape index: {}]
  %s5 = inlined_call_operand.hbm [shape: f32[6,512], index: 5, kind: input, shape index: {}]
  %s6 = inlined_call_operand.hbm [shape: bf16[512,128], index: 6, kind: input, shape index: {}]
  %s7 = inlined_call_operand.hbm [shape: f32[16,128], index: 7, kind: output, shape index: {}]
  %s8 = sld [smem:[#allocation0]]
  $region105: #{tpu_custom_call.1} parent=0
    _
  %s10 = ssub.s32 1, %s8
  %s11 = scalar_select 0, %s10, %s8
  $region1: #{tpu_custom_call.1} parent=0
    #allocation3 [shape = 'u8[32768]{0}', space=vmem, size = 0x8000, scoped, tag = 'input window, operand 0']
    #allocation4 [shape = 's32[2]{0}', space=sflag, size = 0x8, scoped, tag = 'scoped memory for tpu_custom_call.1']
    #allocation5 [shape = 's32[2]{0}', space=sflag, size = 0x8, scoped, tag = 'scoped memory for tpu_custom_call.1']
    #allocation6 [shape = 'u8[32768]{0}', space=vmem, size = 0x8000, scoped, tag = 'input window, operand 1']
    #allocation7 [shape = 's32[2]{0}', space=sflag, size = 0x8, scoped, tag = 'scoped memory for tpu_custom_call.1']
    #allocation8 [shape = 'u8[262144]{0}', space=vmem, size = 0x40000, scoped, tag = 'input window, operand 2']
    #allocation9 [shape = 'u8[8192]{0}', space=vmem, size = 0x2000, scoped, tag = 'input window, operand 3']
    #allocation10 [shape = 's32[2]{0}', space=sflag, size = 0x8, scoped, tag = 'scoped memory for tpu_custom_call.1']
    #allocation11 [shape = 'u8[262144]{0}', space=vmem, size = 0x40000, scoped, tag = 'input window, operand 4, single buffered']
    #allocation12 [shape = 'u8[16384]{0}', space=vmem, size = 0x4000, scoped, tag = 'input window, operand 5, single buffered']
    #allocation13 [shape = 's32[1]{0}', space=sflag, size = 0x4, scoped, tag = 'scoped memory for tpu_custom_call.1']
    #allocation14 [shape = 'u8[131072]{0}', space=vmem, size = 0x20000, scoped, tag = 'input window, operand 6, single buffered']
    #allocation15 [shape = 'u8[8192]{0}', space=vmem, size = 0x2000, scoped, tag = 'output window, operand 0, single buffered']
    %12 = vsyncpa [#allocation4], 0
    %s13 = scalar_lea.sflag [#allocation4], 1
    %14 = vsyncpa %s13, 0
    %15 = vsyncpa [#allocation7], 0
    %s16 = scalar_lea.sflag [#allocation7], 1
    %17 = vsyncpa %s16, 0
    %18 = vsyncpa [#allocation10], 0
    %s19 = scalar_lea.sflag [#allocation10], 1
    %20 = vsyncpa %s19, 0
    %21 = vsyncpa [#allocation13], 0
    %22 = vsyncpa [#allocation5], 0
    loop: start=0, step=1, limit=8
    $region2: #{tpu_custom_call.1} parent=1 // loop_pre_header
      _
    $region3: #{tpu_custom_call.1} parent=1 // loop_header
      %s24 = sphi 0, %s28
      %p25 = scmp.ge.s32.totalorder %s24, 8
      %s31 = sphi 0, %s43
      %s32 = sphi 0, %s39
      %s33 = sphi 0, %s31
      %s34 = sphi 0, %s32
      %s35 = sphi 0, %s33
      %s36 = sphi 0, %s34
      %s46 = sphi 0, %s48
      %s49 = sphi 0, %s46
      %s50 = sphi 0, %s49
      %s66 = sphi 0, %s50
      %s76 = sphi 0, %s78
      %s79 = sphi 0, %s76
      %s80 = sphi 0, %s79
      %s96 = sphi 0, %s80
      %s104 = sphi 0, %s106
      %s107 = sphi 0, %s104
      %s108 = sphi 0, %s107
      %s124 = sphi 0, %s108
      %s134 = sphi 0, %s136
      %s137 = sphi 0, %s134
      %s138 = sphi 0, %s137
      %s154 = sphi 0, %s138
      %s158 = sphi 0, %s158
      %s160 = sphi 0, %s158
      %s161 = sphi 0, %s160
      %s175 = sphi 0, %s161
      %s179 = sphi 0, %s179
      %s181 = sphi 0, %s179
      %s182 = sphi 0, %s181
      %s196 = sphi 0, %s182
      %s200 = sphi 0, %s200
      %s202 = sphi 0, %s200
      %s203 = sphi 0, %s202
      %s217 = sphi 0, %s203
      %s221 = sphi 0, %s221
      %s223 = sphi 0, %s221
      %s224 = sphi 0, %s223
      %s238 = sphi 0, %s224
    $region4: #{tpu_custom_call.1} parent=1 // loop_header_branch
      %27 = sbr.rel (%p25) target = $region8
    $region5: #{tpu_custom_call.1} parent=1 // loop_body
      %s29 = ssub.s32 %s24, 1
      %s30 = ssub.s32 %s24, 2
      %s37 = sadd.s32 1, %s32
      %p38 = scmp.ge.s32.totalorder %s37, 3
      %s39 = scalar_select %p38, 0, %s37
      %s40 = sadd.s32 1, %s31
      %s41 = scalar_select %p38, %s40, %s31
      %p42 = scmp.ge.s32.totalorder %s41, 2
      %s43 = scalar_select %p42, 0, %s41
      %s44 = ssub.s32 %s31, %s43
      %p45 = scmp.eq.s32.totalorder %s44, 0
      %s47 = sadd.s32 %s46, 1
      %s48 = scalar_select %p45, %s46, %s47
      %p51 = pneg %p45
      %p52 = scmp.eq.s32.totalorder %s24, 5
      %p53 = por %p51, %p52
      %p54 = scmp.ne.s32.totalorder %s46, %s49
      %p55 = scmp.eq.s32.totalorder %s24, 0
      %p56 = por %p54, %p55
      %p57 = scmp.ne.s32.totalorder %s46, %s49
      %p58 = scmp.eq.s32.totalorder %s29, 5
      %p59 = por %p57, %p58
      %p60 = scmp.ne.s32.totalorder %s49, %s50
      %p61 = scmp.eq.s32.totalorder %s29, 0
      %p62 = por %p60, %p61
      %p63 = scmp.ne.s32.totalorder %s49, %s50
      %p64 = scmp.eq.s32.totalorder %s30, 5
      %p65 = por %p63, %p64
      %p67 = scmp.ne.s32.totalorder %s50, %s66
      %p68 = scmp.eq.s32.totalorder %s30, 0
      %p69 = por %p67, %p68
      %s70 = smul.u32 %s31, 3
      %s71 = sadd.s32 %s70, %s32
      %s72 = smul.u32 %s43, 3
      %s73 = sadd.s32 %s72, %s39
      %s74 = ssub.s32 %s71, %s73
      %p75 = scmp.eq.s32.totalorder %s74, 0
      %s77 = sadd.s32 %s76, 1
      %s78 = scalar_select %p75, %s76, %s77
      %p81 = pneg %p75
      %p82 = scmp.eq.s32.totalorder %s24, 5
      %p83 = por %p81, %p82
      %p84 = scmp.ne.s32.totalorder %s76, %s79
      %p85 = scmp.eq.s32.totalorder %s24, 0
      %p86 = por %p84, %p85
      %p87 = scmp.ne.s32.totalorder %s76, %s79
      %p88 = scmp.eq.s32.totalorder %s29, 5
      %p89 = por %p87, %p88
      %p90 = scmp.ne.s32.totalorder %s79, %s80
      %p91 = scmp.eq.s32.totalorder %s29, 0
      %p92 = por %p90, %p91
      %p93 = scmp.ne.s32.totalorder %s79, %s80
      %p94 = scmp.eq.s32.totalorder %s30, 5
      %p95 = por %p93, %p94
      %p97 = scmp.ne.s32.totalorder %s80, %s96
      %p98 = scmp.eq.s32.totalorder %s30, 0
      %p99 = por %p97, %p98
      %s100 = ssub.s32 %s31, %s43
      %s101 = ssub.s32 %s32, %s39
      %s102 = sor.u32 %s100, %s101
      %p103 = scmp.eq.s32.totalorder %s102, 0
      %s105 = sadd.s32 %s104, 1
      %s106 = scalar_select %p103, %s104, %s105
      %p109 = pneg %p103
      %p110 = scmp.eq.s32.totalorder %s24, 5
      %p111 = por %p109, %p110
      %p112 = scmp.ne.s32.totalorder %s104, %s107
      %p113 = scmp.eq.s32.totalorder %s24, 0
      %p114 = por %p112, %p113
      %p115 = scmp.ne.s32.totalorder %s104, %s107
      %p116 = scmp.eq.s32.totalorder %s29, 5
      %p117 = por %p115, %p116
      %p118 = scmp.ne.s32.totalorder %s107, %s108
      %p119 = scmp.eq.s32.totalorder %s29, 0
      %p120 = por %p118, %p119
      %p121 = scmp.ne.s32.totalorder %s107, %s108
      %p122 = scmp.eq.s32.totalorder %s30, 5
      %p123 = por %p121, %p122
      %p125 = scmp.ne.s32.totalorder %s108, %s124
      %p126 = scmp.eq.s32.totalorder %s30, 0
      %p127 = por %p125, %p126
      %s128 = smul.u32 %s31, 3
      %s129 = sadd.s32 %s128, %s32
      %s130 = smul.u32 %s43, 3
      %s131 = sadd.s32 %s130, %s39
      %s132 = ssub.s32 %s129, %s131
      %p133 = scmp.eq.s32.totalorder %s132, 0
      %s135 = sadd.s32 %s134, 1
      %s136 = scalar_select %p133, %s134, %s135
      %p139 = pneg %p133
      %p140 = scmp.eq.s32.totalorder %s24, 5
      %p141 = por %p139, %p140
      %p142 = scmp.ne.s32.totalorder %s134, %s137
      %p143 = scmp.eq.s32.totalorder %s24, 0
      %p144 = por %p142, %p143
      %p145 = scmp.ne.s32.totalorder %s134, %s137
      %p146 = scmp.eq.s32.totalorder %s29, 5
      %p147 = por %p145, %p146
      %p148 = scmp.ne.s32.totalorder %s137, %s138
      %p149 = scmp.eq.s32.totalorder %s29, 0
      %p150 = por %p148, %p149
      %p151 = scmp.ne.s32.totalorder %s137, %s138
      %p152 = scmp.eq.s32.totalorder %s30, 5
      %p153 = por %p151, %p152
      %p155 = scmp.ne.s32.totalorder %s138, %s154
      %p156 = scmp.eq.s32.totalorder %s30, 0
      %p157 = por %p155, %p156
      %s159 = sadd.s32 %s158, 1
      %p162 = scmp.eq.s32.totalorder %s24, 5
      %p163 = scmp.ne.s32.totalorder %s158, %s160
      %p164 = scmp.eq.s32.totalorder %s24, 0
      %p165 = por %p163, %p164
      %p166 = scmp.ne.s32.totalorder %s158, %s160
      %p167 = scmp.eq.s32.totalorder %s29, 5
      %p168 = por %p166, %p167
      %p169 = scmp.ne.s32.totalorder %s160, %s161
      %p170 = scmp.eq.s32.totalorder %s29, 0
      %p171 = por %p169, %p170
      %p172 = scmp.ne.s32.totalorder %s160, %s161
      %p173 = scmp.eq.s32.totalorder %s30, 5
      %p174 = por %p172, %p173
      %p176 = scmp.ne.s32.totalorder %s161, %s175
      %p177 = scmp.eq.s32.totalorder %s30, 0
      %p178 = por %p176, %p177
      %s180 = sadd.s32 %s179, 1
      %p183 = scmp.eq.s32.totalorder %s24, 5
      %p184 = scmp.ne.s32.totalorder %s179, %s181
      %p185 = scmp.eq.s32.totalorder %s24, 0
      %p186 = por %p184, %p185
      %p187 = scmp.ne.s32.totalorder %s179, %s181
      %p188 = scmp.eq.s32.totalorder %s29, 5
      %p189 = por %p187, %p188
      %p190 = scmp.ne.s32.totalorder %s181, %s182
      %p191 = scmp.eq.s32.totalorder %s29, 0
      %p192 = por %p190, %p191
      %p193 = scmp.ne.s32.totalorder %s181, %s182
      %p194 = scmp.eq.s32.totalorder %s30, 5
      %p195 = por %p193, %p194
      %p197 = scmp.ne.s32.totalorder %s182, %s196
      %p198 = scmp.eq.s32.totalorder %s30, 0
      %p199 = por %p197, %p198
      %s201 = sadd.s32 %s200, 1
      %p204 = scmp.eq.s32.totalorder %s24, 5
      %p205 = scmp.ne.s32.totalorder %s200, %s202
      %p206 = scmp.eq.s32.totalorder %s24, 0
      %p207 = por %p205, %p206
      %p208 = scmp.ne.s32.totalorder %s200, %s202
      %p209 = scmp.eq.s32.totalorder %s29, 5
      %p210 = por %p208, %p209
      %p211 = scmp.ne.s32.totalorder %s202, %s203
      %p212 = scmp.eq.s32.totalorder %s29, 0
      %p213 = por %p211, %p212
      %p214 = scmp.ne.s32.totalorder %s202, %s203
      %p215 = scmp.eq.s32.totalorder %s30, 5
      %p216 = por %p214, %p215
      %p218 = scmp.ne.s32.totalorder %s203, %s217
      %p219 = scmp.eq.s32.totalorder %s30, 0
      %p220 = por %p218, %p219
      %s222 = sadd.s32 %s221, 1
      %p225 = scmp.eq.s32.totalorder %s24, 5
      %p226 = scmp.ne.s32.totalorder %s221, %s223
      %p227 = scmp.eq.s32.totalorder %s24, 0
      %p228 = por %p226, %p227
      %p229 = scmp.ne.s32.totalorder %s221, %s223
      %p230 = scmp.eq.s32.totalorder %s29, 5
      %p231 = por %p229, %p230
      %p232 = scmp.ne.s32.totalorder %s223, %s224
      %p233 = scmp.eq.s32.totalorder %s29, 0
      %p234 = por %p232, %p233
      %p235 = scmp.ne.s32.totalorder %s223, %s224
      %p236 = scmp.eq.s32.totalorder %s30, 5
      %p237 = por %p235, %p236
      %p239 = scmp.ne.s32.totalorder %s224, %s238
      %p240 = scmp.eq.s32.totalorder %s30, 0
      %p241 = por %p239, %p240
      %p242 = scmp.le.s32.totalorder 1, %s24
      %p243 = scmp.lt.s32.totalorder %s24, 7
      %p244 = pnand %p242, %p243
      %p245 = pneg %p244
      // Predicated region
      $region9: #{tpu_custom_call.1} parent=5 // pred_check
        _
      $region10: #{tpu_custom_call.1} parent=5 // pred_check_branch
        %247 = sbr.rel (%p244) target = $region12
      $region11: #{tpu_custom_call.1} parent=5 // pred_region
        %s248 = ssub.s32 %s24, 1
        // Predicated region
        $region13: #{tpu_custom_call.1} parent=11 // pred_check
          %p249 = pneg %p171
        $region14: #{tpu_custom_call.1} parent=11 // pred_check_branch
          %251 = sbr.rel (%p249) target = $region16
        $region15: #{tpu_custom_call.1} parent=11 // pred_region
          %s253 = ssub.s32 8192, 8192
          %254 = vsyncadd [#allocation10], %s253
          %s255 = sshll.u32 [#allocation11], 4
          %s256 = int_to_ptr.vmem [resolvable:$true] %s255
          %261 = dma.hbm_to_vmem [thread:$0]  %s4, 8192, %s256, [#allocation10], 256, 256, 16
        $region16: #{tpu_custom_call.1} parent=11 // pred_fallthru
          _
        // Predicated region
        $region17: #{tpu_custom_call.1} parent=11 // pred_check
          %p262 = pneg %p192
        $region18: #{tpu_custom_call.1} parent=11 // pred_check_branch
          %264 = sbr.rel (%p262) target = $region20
        $region19: #{tpu_custom_call.1} parent=11 // pred_region
          %s266 = ssub.s32 512, 512
          %267 = vsyncadd [#allocation13], %s266
          %s269 = sshll.u32 [#allocation12], 4
          %s270 = int_to_ptr.vmem [resolvable:$true] %s269
          %272 = dma.hbm_to_vmem [thread:$0]  %s5, 512, %s270, [#allocation13]
        $region20: #{tpu_custom_call.1} parent=11 // pred_fallthru
          _
        // Predicated region
        $region21: #{tpu_custom_call.1} parent=11 // pred_check
          %p273 = pneg %p213
        $region22: #{tpu_custom_call.1} parent=11 // pred_check_branch
          %275 = sbr.rel (%p273) target = $region24
        $region23: #{tpu_custom_call.1} parent=11 // pred_region
          %s277 = ssub.s32 4096, 4096
          %278 = vsyncadd [#allocation13], %s277
          %s279 = sshll.u32 [#allocation14], 4
          %s280 = int_to_ptr.vmem [resolvable:$true] %s279
          %285 = dma.hbm_to_vmem [thread:$0]  %s6, 4096, %s280, [#allocation13], 64, 64, 4
        $region24: #{tpu_custom_call.1} parent=11 // pred_fallthru
          _
      $region12: #{tpu_custom_call.1} parent=5 // pred_fallthru
        _
      %p286 = scmp.lt.s32.totalorder %s24, 6
      // Predicated region
      $region25: #{tpu_custom_call.1} parent=5 // pred_check
        %p287 = pneg %p286
      $region26: #{tpu_custom_call.1} parent=5 // pred_check_branch
        %289 = sbr.rel (%p287) target = $region28
      $region27: #{tpu_custom_call.1} parent=5 // pred_region
        // Predicated region
        $region29: #{tpu_custom_call.1} parent=27 // pred_check
          %p290 = pneg %p56
        $region30: #{tpu_custom_call.1} parent=27 // pred_check_branch
          %292 = sbr.rel (%p290) target = $region32
        $region31: #{tpu_custom_call.1} parent=27 // pred_region
          %s293 = sand.u32 %s46, 1
          %s294 = scalar_lea.sflag [#allocation4], %s293
          %s295 = sand.u32 %s46, 1
          %s296 = smul.addr %s295, 32
          %s297 = scalar_lea.vmem [#allocation3], %s296
          %s299 = ssub.s32 512, 512
          %300 = vsyncadd %s294, %s299
          %s301 = smul.addr %s31, 4
          %s302 = smul.addr %s301, 128
          %s303 = scalar_lea.hbm %s0, %s302
          %s304 = sshll.u32 %s297, 4
          %s305 = int_to_ptr.vmem [resolvable:$true] %s304
          %310 = dma.hbm_to_vmem [thread:$0]  %s303, 512, %s305, %s294, 256, 256, 16
        $region32: #{tpu_custom_call.1} parent=27 // pred_fallthru
          _
        // Predicated region
        $region33: #{tpu_custom_call.1} parent=27 // pred_check
          %p311 = pneg %p86
        $region34: #{tpu_custom_call.1} parent=27 // pred_check_branch
          %313 = sbr.rel (%p311) target = $region36
        $region35: #{tpu_custom_call.1} parent=27 // pred_region
          %s314 = sand.u32 %s24, 1
          %s315 = scalar_lea.sflag [#allocation7], %s314
          %s316 = sand.u32 %s76, 1
          %s317 = smul.addr %s316, 32
          %s318 = scalar_lea.vmem [#allocation6], %s317
          %s319 = smul.u32 %s31, 3
          %s320 = sadd.s32 %s319, %s32
          %s321 = smul.u32 2, %s320
          %s323 = ssub.s32 512, 512
          %324 = vsyncadd %s315, %s323
          %s325 = smul.addr %s321, 128
          %s326 = scalar_lea.hbm %s1, %s325
          %s327 = sshll.u32 %s318, 4
          %s328 = int_to_ptr.vmem [resolvable:$true] %s327
          %333 = dma.hbm_to_vmem [thread:$0]  %s326, 512, %s328, %s315, 1536, 256, 16
        $region36: #{tpu_custom_call.1} parent=27 // pred_fallthru
          _
        // Predicated region
        $region37: #{tpu_custom_call.1} parent=27 // pred_check
          %p334 = pneg %p114
        $region38: #{tpu_custom_call.1} parent=27 // pred_check_branch
          %336 = sbr.rel (%p334) target = $region40
        $region39: #{tpu_custom_call.1} parent=27 // pred_region
          %s337 = sand.u32 %s24, 1
          %s338 = scalar_lea.sflag [#allocation7], %s337
          %s339 = sand.u32 %s104, 1
          %s340 = smul.addr %s339, 256
          %s341 = scalar_lea.vmem [#allocation8], %s340
          %s342 = smul.u32 2, %s32
          %s344 = ssub.s32 4096, 4096
          %345 = vsyncadd %s338, %s344
          %s346 = smul.addr %s31, 192
          %s347 = sadd.s32 %s342, %s346
          %s348 = smul.addr %s347, 64
          %s349 = scalar_lea.hbm %s2, %s348
          %s350 = sshll.u32 %s341, 4
          %s351 = int_to_ptr.vmem [resolvable:$true] %s350
          %356 = dma.hbm_to_vmem [thread:$0]  %s349, 4096, %s351, %s338, 384, 128, 8
        $region40: #{tpu_custom_call.1} parent=27 // pred_fallthru
          _
        // Predicated region
        $region41: #{tpu_custom_call.1} parent=27 // pred_check
          %p357 = pneg %p144
        $region42: #{tpu_custom_call.1} parent=27 // pred_check_branch
          %359 = sbr.rel (%p357) target = $region44
        $region43: #{tpu_custom_call.1} parent=27 // pred_region
          %s360 = sand.u32 %s24, 1
          %s361 = scalar_lea.sflag [#allocation10], %s360
          %s362 = sand.u32 %s134, 1
          %s363 = smul.addr %s362, 8
          %s364 = scalar_lea.vmem [#allocation9], %s363
          %s365 = smul.u32 %s31, 3
          %s366 = sadd.s32 %s365, %s32
          %s367 = smul.u32 2, %s366
          %s369 = ssub.s32 128, 128
          %370 = vsyncadd %s361, %s369
          %s371 = smul.addr %s367, 64
          %s372 = scalar_lea.hbm %s3, %s371
          %s374 = sshll.u32 %s364, 4
          %s375 = int_to_ptr.vmem [resolvable:$true] %s374
          %377 = dma.hbm_to_vmem [thread:$0]  %s372, 128, %s375, %s361
        $region44: #{tpu_custom_call.1} parent=27 // pred_fallthru
          _
      $region28: #{tpu_custom_call.1} parent=5 // pred_fallthru
        _
      %p378 = scmp.le.s32.totalorder 1, %s24
      %p379 = scmp.lt.s32.totalorder %s24, 7
      %p380 = pnand %p378, %p379
      %p381 = pneg %p380
      // Predicated region
      $region45: #{tpu_custom_call.1} parent=5 // pred_check
        _
      $region46: #{tpu_custom_call.1} parent=5 // pred_check_branch
        %383 = sbr.rel (%p380) target = $region48
      $region47: #{tpu_custom_call.1} parent=5 // pred_region
        %s384 = ssub.s32 %s24, 1
        %s385 = sand.u32 %s49, 1
        %s386 = scalar_lea.sflag [#allocation4], %s385
        %s387 = sand.u32 %s49, 1
        %s388 = smul.addr %s387, 32
        %s389 = scalar_lea.vmem [#allocation3], %s388
        // Predicated region
        $region49: #{tpu_custom_call.1} parent=47 // pred_check
          %p390 = pneg %p62
        $region50: #{tpu_custom_call.1} parent=47 // pred_check_branch
          %392 = sbr.rel (%p390) target = $region52
        $region51: #{tpu_custom_call.1} parent=47 // pred_region
          %393 = dma.done %s386, 512
        $region52: #{tpu_custom_call.1} parent=47 // pred_fallthru
          _
        %s394 = sand.u32 %s29, 1
        %s395 = scalar_lea.sflag [#allocation7], %s394
        %s396 = sand.u32 %s79, 1
        %s397 = smul.addr %s396, 32
        %s398 = scalar_lea.vmem [#allocation6], %s397
        // Predicated region
        $region53: #{tpu_custom_call.1} parent=47 // pred_check
          %p399 = pneg %p92
        $region54: #{tpu_custom_call.1} parent=47 // pred_check_branch
          %401 = sbr.rel (%p399) target = $region56
        $region55: #{tpu_custom_call.1} parent=47 // pred_region
          %402 = dma.done %s395, 512
        $region56: #{tpu_custom_call.1} parent=47 // pred_fallthru
          _
        %s403 = sand.u32 %s29, 1
        %s404 = scalar_lea.sflag [#allocation7], %s403
        %s405 = sand.u32 %s107, 1
        %s406 = smul.addr %s405, 256
        %s407 = scalar_lea.vmem [#allocation8], %s406
        // Predicated region
        $region57: #{tpu_custom_call.1} parent=47 // pred_check
          %p408 = pneg %p120
        $region58: #{tpu_custom_call.1} parent=47 // pred_check_branch
          %410 = sbr.rel (%p408) target = $region60
        $region59: #{tpu_custom_call.1} parent=47 // pred_region
          %411 = dma.done %s404, 4096
        $region60: #{tpu_custom_call.1} parent=47 // pred_fallthru
          _
        %s412 = sand.u32 %s29, 1
        %s413 = scalar_lea.sflag [#allocation10], %s412
        %s414 = sand.u32 %s137, 1
        %s415 = smul.addr %s414, 8
        %s416 = scalar_lea.vmem [#allocation9], %s415
        // Predicated region
        $region61: #{tpu_custom_call.1} parent=47 // pred_check
          %p417 = pneg %p150
        $region62: #{tpu_custom_call.1} parent=47 // pred_check_branch
          %419 = sbr.rel (%p417) target = $region64
        $region63: #{tpu_custom_call.1} parent=47 // pred_region
          %420 = dma.done %s413, 128
        $region64: #{tpu_custom_call.1} parent=47 // pred_fallthru
          _
        // Predicated region
        $region65: #{tpu_custom_call.1} parent=47 // pred_check
          %p421 = pneg %p171
        $region66: #{tpu_custom_call.1} parent=47 // pred_check_branch
          %423 = sbr.rel (%p421) target = $region68
        $region67: #{tpu_custom_call.1} parent=47 // pred_region
          %424 = dma.done [#allocation10], 8192
        $region68: #{tpu_custom_call.1} parent=47 // pred_fallthru
          _
        // Predicated region
        $region69: #{tpu_custom_call.1} parent=47 // pred_check
          %p425 = pneg %p192
        $region70: #{tpu_custom_call.1} parent=47 // pred_check_branch
          %427 = sbr.rel (%p425) target = $region72
        $region71: #{tpu_custom_call.1} parent=47 // pred_region
          %428 = dma.done [#allocation13], 512
        $region72: #{tpu_custom_call.1} parent=47 // pred_fallthru
          _
        // Predicated region
        $region73: #{tpu_custom_call.1} parent=47 // pred_check
          %p429 = pneg %p213
        $region74: #{tpu_custom_call.1} parent=47 // pred_check_branch
          %431 = sbr.rel (%p429) target = $region76
        $region75: #{tpu_custom_call.1} parent=47 // pred_region
          %432 = dma.done [#allocation13], 4096
        $region76: #{tpu_custom_call.1} parent=47 // pred_fallthru
          _
        %s433 = sand.u32 %s49, 1
        %s434 = scalar_lea.sflag [#allocation4], %s433
        %s435 = sand.u32 %s49, 1
        %s436 = smul.addr %s435, 32
        %s437 = scalar_lea.vmem [#allocation3], %s436
        %p438 = pneg %p62
        %p439 = pneg %p59
        %s440 = sand.u32 %s29, 1
        %s441 = scalar_lea.sflag [#allocation7], %s440
        %s442 = sand.u32 %s79, 1
        %s443 = smul.addr %s442, 32
        %s444 = scalar_lea.vmem [#allocation6], %s443
        %p445 = pneg %p92
        %p446 = pneg %p89
        %s447 = sand.u32 %s29, 1
        %s448 = scalar_lea.sflag [#allocation7], %s447
        %s449 = sand.u32 %s107, 1
        %s450 = smul.addr %s449, 256
        %s451 = scalar_lea.vmem [#allocation8], %s450
        %p452 = pneg %p120
        %p453 = pneg %p117
        %s454 = sand.u32 %s29, 1
        %s455 = scalar_lea.sflag [#allocation10], %s454
        %s456 = sand.u32 %s137, 1
        %s457 = smul.addr %s456, 8
        %s458 = scalar_lea.vmem [#allocation9], %s457
        %p459 = pneg %p150
        %p460 = pneg %p147
        %p461 = pneg %p171
        %p462 = pneg %p168
        %p463 = pneg %p192
        %p464 = pneg %p189
        %p465 = pneg %p213
        %p466 = pneg %p210
        %p467 = pneg %p234
        %p468 = pneg %p231
        %s469 = smul.u32 %s33, 3
        %s470 = sadd.s32 %s469, %s34
        %s471 = smul.u32 2, %s470
        %s472 = smul.u32 2, %s34
        %s473 = smul.u32 %s33, 3
        %s474 = sadd.s32 %s473, %s34
        %s475 = smul.u32 2, %s474
        %p477 = scmp.eq.s32.totalorder %s33, 0
        %p478 = scmp.eq.s32.totalorder %s34, 0
        %p479 = pnand %p477, %p478
        %p480 = pneg %p479
        // Predicated region
        $region77: #{tpu_custom_call.1} parent=47 // pred_check
          _
        $region78: #{tpu_custom_call.1} parent=47 // pred_check_branch
          %482 = sbr.rel (%p479) target = $region80
        $region79: #{tpu_custom_call.1} parent=47 // pred_region
          %483 = vst [vmem:[#allocation2] sm:$0xff] 0.0
          %484 = vst [vmem:[#allocation2 + $0x8] sm:$0xff] 0.0
          %485 = vst [vmem:[#allocation2 + $0x10] sm:$0xff] 0.0
          %486 = vst [vmem:[#allocation2 + $0x18] sm:$0xff] 0.0
        $region80: #{tpu_custom_call.1} parent=47 // pred_fallthru
          _
        %v487 = vld [vmem:[%s416] sm:$0x77]
        %v488 = vld [vmem:[%s389] sm:$0xff]
        %v489 = vld [vmem:[%s389 + $0x8] sm:$0xff]
        %v490 = vld [vmem:[%s389 + $0x10] sm:$0xff]
        %v491 = vld [vmem:[%s389 + $0x18] sm:$0xff]
        %v492 = vld [vmem:[%s407] sm:$0xff]
        %v493 = vld [vmem:[%s407 + $0x8] sm:$0xff]
        %v494 = vld [vmem:[%s407 + $0x10] sm:$0xff]
        %v495 = vld [vmem:[%s407 + $0x18] sm:$0xff]
        %v496 = vld [vmem:[%s407 + $0x20] sm:$0xff]
        %v497 = vld [vmem:[%s407 + $0x28] sm:$0xff]
        %v498 = vld [vmem:[%s407 + $0x30] sm:$0xff]
        %v499 = vld [vmem:[%s407 + $0x38] sm:$0xff]
        %v500 = vld [vmem:[%s407 + $0x40] sm:$0xff]
        %v501 = vld [vmem:[%s407 + $0x48] sm:$0xff]
        %v502 = vld [vmem:[%s407 + $0x50] sm:$0xff]
        %v503 = vld [vmem:[%s407 + $0x58] sm:$0xff]
        %v504 = vld [vmem:[%s407 + $0x60] sm:$0xff]
        %v505 = vld [vmem:[%s407 + $0x68] sm:$0xff]
        %v506 = vld [vmem:[%s407 + $0x70] sm:$0xff]
        %v507 = vld [vmem:[%s407 + $0x78] sm:$0xff]
        %v508 = vld [vmem:[%s407 + $0x80] sm:$0xff]
        %v509 = vld [vmem:[%s407 + $0x88] sm:$0xff]
        %v510 = vld [vmem:[%s407 + $0x90] sm:$0xff]
        %v511 = vld [vmem:[%s407 + $0x98] sm:$0xff]
        %v512 = vld [vmem:[%s407 + $0xa0] sm:$0xff]
        %v513 = vld [vmem:[%s407 + $0xa8] sm:$0xff]
        %v514 = vld [vmem:[%s407 + $0xb0] sm:$0xff]
        %v515 = vld [vmem:[%s407 + $0xb8] sm:$0xff]
        %v516 = vld [vmem:[%s407 + $0xc0] sm:$0xff]
        %v517 = vld [vmem:[%s407 + $0xc8] sm:$0xff]
        %v518 = vld [vmem:[%s407 + $0xd0] sm:$0xff]
        %v519 = vld [vmem:[%s407 + $0xd8] sm:$0xff]
        %v520 = vld [vmem:[%s407 + $0xe0] sm:$0xff]
        %v521 = vld [vmem:[%s407 + $0xe8] sm:$0xff]
        %v522 = vld [vmem:[%s407 + $0xf0] sm:$0xff]
        %v523 = vld [vmem:[%s407 + $0xf8] sm:$0xff]
        %v524 = vpack.c.bf16 %v490, %v488
        %v525 = vpack.c.bf16 %v491, %v489
        %v527 = vlaneseq
        %v528 = vshrl.u32 %v527, 7
        %v529 = vsub.s32 0, %v528
        %v530 = vrot.slane %v487, %v529
        %v531 = vlaneseq
        %v532 = vshrl.u32 %v531, 7
        %v533 = vsub.s32 4, %v532
        %v534 = vrot.slane %v487, %v533
        %v537 = vlaneseq
        %v538 = vshrl.u32 %v537, 7
        %v539 = vsub.s32 0, %v538
        %v540 = vrot.slane %v530, %v539
        %v541 = vlaneseq
        %v542 = vshrl.u32 %v541, 7
        %v543 = vsub.s32 0, %v542
        %v544 = vrot.slane %v534, %v543
        %v577 = vunpack.c.l.b16 %v492
        %v578 = vunpack.c.h.b16 %v492
        %v579 = vunpack.c.l.b16 %v493
        %v580 = vunpack.c.h.b16 %v493
        %v581 = vunpack.c.l.b16 %v494
        %v582 = vunpack.c.h.b16 %v494
        %v583 = vunpack.c.l.b16 %v495
        %v584 = vunpack.c.h.b16 %v495
        %v585 = vunpack.c.l.b16 %v496
        %v586 = vunpack.c.h.b16 %v496
        %v587 = vunpack.c.l.b16 %v497
        %v588 = vunpack.c.h.b16 %v497
        %v589 = vunpack.c.l.b16 %v498
        %v590 = vunpack.c.h.b16 %v498
        %v591 = vunpack.c.l.b16 %v499
        %v592 = vunpack.c.h.b16 %v499
        %v593 = vunpack.c.l.b16 %v500
        %v594 = vunpack.c.h.b16 %v500
        %v595 = vunpack.c.l.b16 %v501
        %v596 = vunpack.c.h.b16 %v501
        %v597 = vunpack.c.l.b16 %v502
        %v598 = vunpack.c.h.b16 %v502
        %v599 = vunpack.c.l.b16 %v503
        %v600 = vunpack.c.h.b16 %v503
        %v601 = vunpack.c.l.b16 %v504
        %v602 = vunpack.c.h.b16 %v504
        %v603 = vunpack.c.l.b16 %v505
        %v604 = vunpack.c.h.b16 %v505
        %v605 = vunpack.c.l.b16 %v506
        %v606 = vunpack.c.h.b16 %v506
        %v607 = vunpack.c.l.b16 %v507
        %v608 = vunpack.c.h.b16 %v507
        %v609 = vunpack.c.l.b16 %v508
        %v610 = vunpack.c.h.b16 %v508
        %v611 = vunpack.c.l.b16 %v509
        %v612 = vunpack.c.h.b16 %v509
        %v613 = vunpack.c.l.b16 %v510
        %v614 = vunpack.c.h.b16 %v510
        %v615 = vunpack.c.l.b16 %v511
        %v616 = vunpack.c.h.b16 %v511
        %v617 = vunpack.c.l.b16 %v512
        %v618 = vunpack.c.h.b16 %v512
        %v619 = vunpack.c.l.b16 %v513
        %v620 = vunpack.c.h.b16 %v513
        %v621 = vunpack.c.l.b16 %v514
        %v622 = vunpack.c.h.b16 %v514
        %v623 = vunpack.c.l.b16 %v515
        %v624 = vunpack.c.h.b16 %v515
        %v625 = vunpack.c.l.b16 %v516
        %v626 = vunpack.c.h.b16 %v516
        %v627 = vunpack.c.l.b16 %v517
        %v628 = vunpack.c.h.b16 %v517
        %v629 = vunpack.c.l.b16 %v518
        %v630 = vunpack.c.h.b16 %v518
        %v631 = vunpack.c.l.b16 %v519
        %v632 = vunpack.c.h.b16 %v519
        %v633 = vunpack.c.l.b16 %v520
        %v634 = vunpack.c.h.b16 %v520
        %v635 = vunpack.c.l.b16 %v521
        %v636 = vunpack.c.h.b16 %v521
        %v637 = vunpack.c.l.b16 %v522
        %v638 = vunpack.c.h.b16 %v522
        %v639 = vunpack.c.l.b16 %v523
        %v640 = vunpack.c.h.b16 %v523
        %v641 = vpack.c.b16 %v579, %v577
        %v642 = vpack.c.b16 %v580, %v578
        %v643 = vpack.c.b16 %v583, %v581
        %v644 = vpack.c.b16 %v584, %v582
        %v645 = vpack.c.b16 %v587, %v585
        %v646 = vpack.c.b16 %v588, %v586
        %v647 = vpack.c.b16 %v591, %v589
        %v648 = vpack.c.b16 %v592, %v590
        %v649 = vpack.c.b16 %v595, %v593
        %v650 = vpack.c.b16 %v596, %v594
        %v651 = vpack.c.b16 %v599, %v597
        %v652 = vpack.c.b16 %v600, %v598
        %v653 = vpack.c.b16 %v603, %v601
        %v654 = vpack.c.b16 %v604, %v602
        %v655 = vpack.c.b16 %v607, %v605
        %v656 = vpack.c.b16 %v608, %v606
        %v657 = vpack.c.b16 %v611, %v609
        %v658 = vpack.c.b16 %v612, %v610
        %v659 = vpack.c.b16 %v615, %v613
        %v660 = vpack.c.b16 %v616, %v614
        %v661 = vpack.c.b16 %v619, %v617
        %v662 = vpack.c.b16 %v620, %v618
        %v663 = vpack.c.b16 %v623, %v621
        %v664 = vpack.c.b16 %v624, %v622
        %v665 = vpack.c.b16 %v627, %v625
        %v666 = vpack.c.b16 %v628, %v626
        %v667 = vpack.c.b16 %v631, %v629
        %v668 = vpack.c.b16 %v632, %v630
        %v669 = vpack.c.b16 %v635, %v633
        %v670 = vpack.c.b16 %v636, %v634
        %v671 = vpack.c.b16 %v639, %v637
        %v672 = vpack.c.b16 %v640, %v638
        %705 = vmatprep.subr.bf16.mxu0 %v642
        %706 = vmatpush1.bf16.msra.mxu0 %v641
        %707 = vmatprep.subr.bf16.mxu0 %v644
        %708 = vmatpush1.bf16.msra.mxu0 %v643
        %709 = vmatprep.subr.bf16.mxu0 %v646
        %710 = vmatpush1.bf16.msra.mxu0 %v645
        %711 = vmatprep.subr.bf16.mxu0 %v648
        %712 = vmatpush1.bf16.msra.mxu0 %v647
        %713 = vmatprep.subr.bf16.mxu0 %v650
        %714 = vmatpush1.bf16.msra.mxu0 %v649
        %715 = vmatprep.subr.bf16.mxu0 %v652
        %716 = vmatpush1.bf16.msra.mxu0 %v651
        %717 = vmatprep.subr.bf16.mxu0 %v654
        %718 = vmatpush1.bf16.msra.mxu0 %v653
        %719 = vmatprep.subr.bf16.mxu0 %v656
        %720 = vmatpush1.bf16.msra.mxu0 %v655
        %721 = vmatprep.subr.bf16.mxu0 %v658
        %722 = vmatpush1.bf16.msra.mxu0 %v657
        %723 = vmatprep.subr.bf16.mxu0 %v660
        %724 = vmatpush1.bf16.msra.mxu0 %v659
        %725 = vmatprep.subr.bf16.mxu0 %v662
        %726 = vmatpush1.bf16.msra.mxu0 %v661
        %727 = vmatprep.subr.bf16.mxu0 %v664
        %728 = vmatpush1.bf16.msra.mxu0 %v663
        %729 = vmatprep.subr.bf16.mxu0 %v666
        %730 = vmatpush1.bf16.msra.mxu0 %v665
        %731 = vmatprep.subr.bf16.mxu0 %v668
        %732 = vmatpush1.bf16.msra.mxu0 %v667
        %733 = vmatprep.subr.bf16.mxu0 %v670
        %734 = vmatpush1.bf16.msra.mxu0 %v669
        %735 = vmatprep.subr.bf16.mxu0 %v672
        %736 = vmatpush1.bf16.msra.mxu0 %v671
        %737 = vmatprep.mubr.bf16.mxu0 %v525
        %738 = vmatmul.mubr.bf16.gmra.mrb[0].mxu0 %v524
        %v739 = vpop.f32.mrb[0].mxu0
        %v740 = vadd.f32 %v540, %v739
        %v741 = vpop.f32.mrb[0].mxu0
        %v742 = vadd.f32 %v544, %v741
        %v743 = vpop.f32.mrb[0].mxu0
        %v744 = vadd.f32 %v540, %v743
        %v745 = vpop.f32.mrb[0].mxu0
        %v746 = vadd.f32 %v544, %v745
        %747 = vdwg.mxu0
        %v748 = vadd.f32 %v740, %v744
        %v749 = vrot.slane %v748, 4
        %v750 = vadd.f32 %v748, %v749
        %v751 = vrot.slane %v750, 2
        %v752 = vadd.f32 %v750, %v751
        %v753 = vrot.slane %v752, 1
        %v754 = vadd.f32 %v752, %v753
        %v755 = vadd.f32 %v742, %v746
        %v756 = vrot.slane %v755, 4
        %v757 = vadd.f32 %v755, %v756
        %v758 = vrot.slane %v757, 2
        %v759 = vadd.f32 %v757, %v758
        %v760 = vrot.slane %v759, 1
        %v761 = vadd.f32 %v759, %v760
        %v762 = vrcp.pop 16.0
        %v763 = vmul.f32 %v754, %v762
        %v764 = vmul.f32 %v761, %v762
        %v765 = vsub.f32 %v740, %v763
        %v766 = vsub.f32 %v742, %v764
        %v767 = vsub.f32 %v744, %v763
        %v768 = vsub.f32 %v746, %v764
        %v769 = vmul.f32 %v765, %v765
        %v770 = vmul.f32 %v766, %v766
        %v771 = vmul.f32 %v767, %v767
        %v772 = vmul.f32 %v768, %v768
        %v773 = vadd.f32 %v769, %v771
        %v774 = vrot.slane %v773, 4
        %v775 = vadd.f32 %v773, %v774
        %v776 = vrot.slane %v775, 2
        %v777 = vadd.f32 %v775, %v776
        %v778 = vrot.slane %v777, 1
        %v779 = vadd.f32 %v777, %v778
        %v780 = vadd.f32 %v770, %v772
        %v781 = vrot.slane %v780, 4
        %v782 = vadd.f32 %v780, %v781
        %v783 = vrot.slane %v782, 2
        %v784 = vadd.f32 %v782, %v783
        %v785 = vrot.slane %v784, 1
        %v786 = vadd.f32 %v784, %v785
        %v787 = vmul.f32 %v779, %v762
        %v788 = vmul.f32 %v786, %v762
        %v789 = vadd.f32 %v787, 1e-05
        %v790 = vadd.f32 %v788, 1e-05
        %v791 = vrsqrt.pop %v789
        %v792 = vrsqrt.pop %v790
        %v793 = vmul.f32 %v765, %v791
        %v794 = vmul.f32 %v766, %v792
        %v795 = vmul.f32 %v767, %v791
        %v796 = vmul.f32 %v768, %v792
        %v797 = vlaneseq
        %v798 = vshrl.u32 %v797, 7
        %v799 = vsub.s32 1, %v798
        %v800 = vrot.slane %v487, %v799
        %v801 = vlaneseq
        %v802 = vshrl.u32 %v801, 7
        %v803 = vsub.s32 5, %v802
        %v804 = vrot.slane %v487, %v803
        %v807 = vlaneseq
        %v808 = vshrl.u32 %v807, 7
        %v809 = vsub.s32 1, %v808
        %v810 = vrot.slane %v800, %v809
        %v811 = vlaneseq
        %v812 = vshrl.u32 %v811, 7
        %v813 = vsub.s32 1, %v812
        %v814 = vrot.slane %v804, %v813
        %v815 = vmul.f32 %v793, %v810
        %v816 = vmul.f32 %v794, %v814
        %v817 = vmul.f32 %v795, %v810
        %v818 = vmul.f32 %v796, %v814
        %v819 = vlaneseq
        %v820 = vshrl.u32 %v819, 7
        %v821 = vsub.s32 2, %v820
        %v822 = vrot.slane %v487, %v821
        %v823 = vlaneseq
        %v824 = vshrl.u32 %v823, 7
        %v825 = vsub.s32 6, %v824
        %v826 = vrot.slane %v487, %v825
        %v829 = vlaneseq
        %v830 = vshrl.u32 %v829, 7
        %v831 = vsub.s32 2, %v830
        %v832 = vrot.slane %v822, %v831
        %v833 = vlaneseq
        %v834 = vshrl.u32 %v833, 7
        %v835 = vsub.s32 2, %v834
        %v836 = vrot.slane %v826, %v835
        %v837 = vadd.f32 %v815, %v832
        %v838 = vadd.f32 %v816, %v836
        %v839 = vadd.f32 %v817, %v832
        %v840 = vadd.f32 %v818, %v836
        %v841 = vtanh.pop %v837
        %v842 = vtanh.pop %v838
        %v843 = vtanh.pop %v839
        %v844 = vtanh.pop %v840
        %v845 = vld [vmem:[%s398] sm:$0xff]
        %v846 = vld [vmem:[%s398 + $0x8] sm:$0xff]
        %v847 = vld [vmem:[%s398 + $0x10] sm:$0xff]
        %v848 = vld [vmem:[%s398 + $0x18] sm:$0xff]
        %v849 = vmul.f32 %v841, %v845
        %v850 = vmul.f32 %v842, %v846
        %v851 = vmul.f32 %v843, %v847
        %v852 = vmul.f32 %v844, %v848
        %v853 = vadd.f32 %v849, %v850
        %v854 = vadd.f32 %v851, %v852
        // Predicated region
        $region81: #{tpu_custom_call.1} parent=47 // pred_check
          %p855 = pneg %p477
        $region82: #{tpu_custom_call.1} parent=47 // pred_check_branch
          %857 = sbr.rel (%p855) target = $region84
        $region83: #{tpu_custom_call.1} parent=47 // pred_region
          %v858 = vld [vmem:[#allocation2] sm:$0xff]
          %v859 = vld [vmem:[#allocation2 + $0x8] sm:$0xff]
          %v860 = vadd.f32 %v858, %v853
          %v861 = vadd.f32 %v859, %v854
          %862 = vst [vmem:[#allocation2] sm:$0xff] %v860
          %863 = vst [vmem:[#allocation2 + $0x8] sm:$0xff] %v861
        $region84: #{tpu_custom_call.1} parent=47 // pred_fallthru
          _
        %p864 = scmp.eq.s32.totalorder %s33, 1
        // Predicated region
        $region85: #{tpu_custom_call.1} parent=47 // pred_check
          %p865 = pneg %p864
        $region86: #{tpu_custom_call.1} parent=47 // pred_check_branch
          %867 = sbr.rel (%p865) target = $region88
        $region87: #{tpu_custom_call.1} parent=47 // pred_region
          %s868 = scalar_lea.vmem [#allocation2], 16
          %v869 = vld [vmem:[%s868] sm:$0xff]
          %v870 = vld [vmem:[%s868 + $0x8] sm:$0xff]
          %v871 = vadd.f32 %v869, %v853
          %v872 = vadd.f32 %v870, %v854
          %873 = vst [vmem:[%s868] sm:$0xff] %v871
          %874 = vst [vmem:[%s868 + $0x8] sm:$0xff] %v872
        $region88: #{tpu_custom_call.1} parent=47 // pred_fallthru
          _
        %p875 = scmp.eq.s32.totalorder %s34, 2
        %p876 = pnand %p864, %p875
        %p877 = pneg %p876
        // Predicated region
        $region89: #{tpu_custom_call.1} parent=47 // pred_check
          _
        $region90: #{tpu_custom_call.1} parent=47 // pred_check_branch
          %879 = sbr.rel (%p876) target = $region92
        $region91: #{tpu_custom_call.1} parent=47 // pred_region
          %v880 = vld [vmem:[#allocation12] sm:$0x3f]
          %v881 = vld [vmem:[#allocation12 + $0x8] sm:$0x3f]
          %v882 = vld [vmem:[#allocation12 + $0x10] sm:$0x3f]
          %v883 = vld [vmem:[#allocation12 + $0x18] sm:$0x3f]
          %v884 = vld [vmem:[#allocation2] sm:$0xff]
          %v885 = vld [vmem:[#allocation2 + $0x8] sm:$0xff]
          %v886 = vadd.f32 %v884, %v885
          %v887 = vrot.slane %v886, 4
          %v888 = vadd.f32 %v886, %v887
          %v889 = vrot.slane %v888, 2
          %v890 = vadd.f32 %v888, %v889
          %v891 = vrot.slane %v890, 1
          %v892 = vadd.f32 %v890, %v891
          %v893 = vmul.f32 %v892, %v762
          %v894 = vsub.f32 %v884, %v893
          %v895 = vsub.f32 %v885, %v893
          %v896 = vmul.f32 %v894, %v894
          %v897 = vmul.f32 %v895, %v895
          %v898 = vadd.f32 %v896, %v897
          %v899 = vrot.slane %v898, 4
          %v900 = vadd.f32 %v898, %v899
          %v901 = vrot.slane %v900, 2
          %v902 = vadd.f32 %v900, %v901
          %v903 = vrot.slane %v902, 1
          %v904 = vadd.f32 %v902, %v903
          %v905 = vmul.f32 %v904, %v762
          %v906 = vadd.f32 %v905, 1e-05
          %v907 = vrsqrt.pop %v906
          %v908 = vmul.f32 %v894, %v907
          %v909 = vmul.f32 %v895, %v907
          %v910 = vlaneseq
          %v911 = vshrl.u32 %v910, 7
          %v912 = vsub.s32 0, %v911
          %v913 = vrot.slane %v880, %v912
          %v914 = vmul.f32 %v908, %v913
          %v915 = vmul.f32 %v909, %v913
          %v916 = vlaneseq
          %v917 = vshrl.u32 %v916, 7
          %v918 = vsub.s32 1, %v917
          %v919 = vrot.slane %v880, %v918
          %v920 = vadd.f32 %v914, %v919
          %v921 = vadd.f32 %v915, %v919
          %s922 = scalar_lea.vmem [#allocation2], 16
          %v923 = vld [vmem:[%s922] sm:$0xff]
          %v924 = vld [vmem:[%s922 + $0x8] sm:$0xff]
          %v925 = vadd.f32 %v923, %v924
          %v926 = vrot.slane %v925, 4
          %v927 = vadd.f32 %v925, %v926
          %v928 = vrot.slane %v927, 2
          %v929 = vadd.f32 %v927, %v928
          %v930 = vrot.slane %v929, 1
          %v931 = vadd.f32 %v929, %v930
          %v932 = vmul.f32 %v931, %v762
          %v933 = vsub.f32 %v923, %v932
          %v934 = vsub.f32 %v924, %v932
          %v935 = vmul.f32 %v933, %v933
          %v936 = vmul.f32 %v934, %v934
          %v937 = vadd.f32 %v935, %v936
          %v938 = vrot.slane %v937, 4
          %v939 = vadd.f32 %v937, %v938
          %v940 = vrot.slane %v939, 2
          %v941 = vadd.f32 %v939, %v940
          %v942 = vrot.slane %v941, 1
          %v943 = vadd.f32 %v941, %v942
          %v944 = vmul.f32 %v943, %v762
          %v945 = vadd.f32 %v944, 1e-05
          %v946 = vrsqrt.pop %v945
          %v947 = vmul.f32 %v933, %v946
          %v948 = vmul.f32 %v934, %v946
          %v949 = vlaneseq
          %v950 = vshrl.u32 %v949, 7
          %v951 = vsub.s32 0, %v950
          %v952 = vrot.slane %v881, %v951
          %v953 = vmul.f32 %v947, %v952
          %v954 = vmul.f32 %v948, %v952
          %v955 = vlaneseq
          %v956 = vshrl.u32 %v955, 7
          %v957 = vsub.s32 1, %v956
          %v958 = vrot.slane %v881, %v957
          %v959 = vadd.f32 %v953, %v958
          %v960 = vadd.f32 %v954, %v958
          %v961 = vld [vmem:[#allocation11] sm:$0xff]
          %v962 = vld [vmem:[#allocation11 + $0x8] sm:$0xff]
          %v963 = vld [vmem:[#allocation11 + $0x10] sm:$0xff]
          %v964 = vld [vmem:[#allocation11 + $0x18] sm:$0xff]
          %v965 = vld [vmem:[#allocation11 + $0x20] sm:$0xff]
          %v966 = vld [vmem:[#allocation11 + $0x28] sm:$0xff]
          %v967 = vld [vmem:[#allocation11 + $0x30] sm:$0xff]
          %v968 = vld [vmem:[#allocation11 + $0x38] sm:$0xff]
          %v969 = vld [vmem:[#allocation11 + $0x40] sm:$0xff]
          %v970 = vld [vmem:[#allocation11 + $0x48] sm:$0xff]
          %v971 = vld [vmem:[#allocation11 + $0x50] sm:$0xff]
          %v972 = vld [vmem:[#allocation11 + $0x58] sm:$0xff]
          %v973 = vld [vmem:[#allocation11 + $0x60] sm:$0xff]
          %v974 = vld [vmem:[#allocation11 + $0x68] sm:$0xff]
          %v975 = vld [vmem:[#allocation11 + $0x70] sm:$0xff]
          %v976 = vld [vmem:[#allocation11 + $0x78] sm:$0xff]
          %v977 = vld [vmem:[#allocation11 + $0x80] sm:$0xff]
          %v978 = vld [vmem:[#allocation11 + $0x88] sm:$0xff]
          %v979 = vld [vmem:[#allocation11 + $0x90] sm:$0xff]
          %v980 = vld [vmem:[#allocation11 + $0x98] sm:$0xff]
          %v981 = vld [vmem:[#allocation11 + $0xa0] sm:$0xff]
          %v982 = vld [vmem:[#allocation11 + $0xa8] sm:$0xff]
          %v983 = vld [vmem:[#allocation11 + $0xb0] sm:$0xff]
          %v984 = vld [vmem:[#allocation11 + $0xb8] sm:$0xff]
          %v985 = vld [vmem:[#allocation11 + $0xc0] sm:$0xff]
          %v986 = vld [vmem:[#allocation11 + $0xc8] sm:$0xff]
          %v987 = vld [vmem:[#allocation11 + $0xd0] sm:$0xff]
          %v988 = vld [vmem:[#allocation11 + $0xd8] sm:$0xff]
          %v989 = vld [vmem:[#allocation11 + $0xe0] sm:$0xff]
          %v990 = vld [vmem:[#allocation11 + $0xe8] sm:$0xff]
          %v991 = vld [vmem:[#allocation11 + $0xf0] sm:$0xff]
          %v992 = vld [vmem:[#allocation11 + $0xf8] sm:$0xff]
          %v993 = vpack.c.bf16 %v921, %v920
          %v994 = vld [vmem:[#allocation11 + $0x100] sm:$0xff]
          %v995 = vld [vmem:[#allocation11 + $0x108] sm:$0xff]
          %v996 = vld [vmem:[#allocation11 + $0x110] sm:$0xff]
          %v997 = vld [vmem:[#allocation11 + $0x118] sm:$0xff]
          %v998 = vld [vmem:[#allocation11 + $0x120] sm:$0xff]
          %v999 = vld [vmem:[#allocation11 + $0x128] sm:$0xff]
          %v1000 = vld [vmem:[#allocation11 + $0x130] sm:$0xff]
          %v1001 = vld [vmem:[#allocation11 + $0x138] sm:$0xff]
          %v1002 = vld [vmem:[#allocation11 + $0x140] sm:$0xff]
          %v1003 = vld [vmem:[#allocation11 + $0x148] sm:$0xff]
          %v1004 = vld [vmem:[#allocation11 + $0x150] sm:$0xff]
          %v1005 = vld [vmem:[#allocation11 + $0x158] sm:$0xff]
          %v1006 = vld [vmem:[#allocation11 + $0x160] sm:$0xff]
          %v1007 = vld [vmem:[#allocation11 + $0x168] sm:$0xff]
          %v1008 = vld [vmem:[#allocation11 + $0x170] sm:$0xff]
          %v1009 = vld [vmem:[#allocation11 + $0x178] sm:$0xff]
          %v1010 = vld [vmem:[#allocation11 + $0x180] sm:$0xff]
          %v1011 = vld [vmem:[#allocation11 + $0x188] sm:$0xff]
          %v1012 = vld [vmem:[#allocation11 + $0x190] sm:$0xff]
          %v1013 = vld [vmem:[#allocation11 + $0x198] sm:$0xff]
          %v1014 = vld [vmem:[#allocation11 + $0x1a0] sm:$0xff]
          %v1015 = vld [vmem:[#allocation11 + $0x1a8] sm:$0xff]
          %v1016 = vld [vmem:[#allocation11 + $0x1b0] sm:$0xff]
          %v1017 = vld [vmem:[#allocation11 + $0x1b8] sm:$0xff]
          %v1018 = vld [vmem:[#allocation11 + $0x1c0] sm:$0xff]
          %v1019 = vld [vmem:[#allocation11 + $0x1c8] sm:$0xff]
          %v1020 = vld [vmem:[#allocation11 + $0x1d0] sm:$0xff]
          %v1021 = vld [vmem:[#allocation11 + $0x1d8] sm:$0xff]
          %v1022 = vld [vmem:[#allocation11 + $0x1e0] sm:$0xff]
          %v1023 = vld [vmem:[#allocation11 + $0x1e8] sm:$0xff]
          %v1024 = vld [vmem:[#allocation11 + $0x1f0] sm:$0xff]
          %v1025 = vld [vmem:[#allocation11 + $0x1f8] sm:$0xff]
          %v1026 = vpack.c.bf16 %v960, %v959
          %v1059 = vunpack.c.l.b16 %v994
          %v1060 = vunpack.c.h.b16 %v994
          %v1061 = vunpack.c.l.b16 %v995
          %v1062 = vunpack.c.h.b16 %v995
          %v1063 = vunpack.c.l.b16 %v996
          %v1064 = vunpack.c.h.b16 %v996
          %v1065 = vunpack.c.l.b16 %v997
          %v1066 = vunpack.c.h.b16 %v997
          %v1067 = vunpack.c.l.b16 %v998
          %v1068 = vunpack.c.h.b16 %v998
          %v1069 = vunpack.c.l.b16 %v999
          %v1070 = vunpack.c.h.b16 %v999
          %v1071 = vunpack.c.l.b16 %v1000
          %v1072 = vunpack.c.h.b16 %v1000
          %v1073 = vunpack.c.l.b16 %v1001
          %v1074 = vunpack.c.h.b16 %v1001
          %v1075 = vunpack.c.l.b16 %v1002
          %v1076 = vunpack.c.h.b16 %v1002
          %v1077 = vunpack.c.l.b16 %v1003
          %v1078 = vunpack.c.h.b16 %v1003
          %v1079 = vunpack.c.l.b16 %v1004
          %v1080 = vunpack.c.h.b16 %v1004
          %v1081 = vunpack.c.l.b16 %v1005
          %v1082 = vunpack.c.h.b16 %v1005
          %v1083 = vunpack.c.l.b16 %v1006
          %v1084 = vunpack.c.h.b16 %v1006
          %v1085 = vunpack.c.l.b16 %v1007
          %v1086 = vunpack.c.h.b16 %v1007
          %v1087 = vunpack.c.l.b16 %v1008
          %v1088 = vunpack.c.h.b16 %v1008
          %v1089 = vunpack.c.l.b16 %v1009
          %v1090 = vunpack.c.h.b16 %v1009
          %v1091 = vunpack.c.l.b16 %v1010
          %v1092 = vunpack.c.h.b16 %v1010
          %v1093 = vunpack.c.l.b16 %v1011
          %v1094 = vunpack.c.h.b16 %v1011
          %v1095 = vunpack.c.l.b16 %v1012
          %v1096 = vunpack.c.h.b16 %v1012
          %v1097 = vunpack.c.l.b16 %v1013
          %v1098 = vunpack.c.h.b16 %v1013
          %v1099 = vunpack.c.l.b16 %v1014
          %v1100 = vunpack.c.h.b16 %v1014
          %v1101 = vunpack.c.l.b16 %v1015
          %v1102 = vunpack.c.h.b16 %v1015
          %v1103 = vunpack.c.l.b16 %v1016
          %v1104 = vunpack.c.h.b16 %v1016
          %v1105 = vunpack.c.l.b16 %v1017
          %v1106 = vunpack.c.h.b16 %v1017
          %v1107 = vunpack.c.l.b16 %v1018
          %v1108 = vunpack.c.h.b16 %v1018
          %v1109 = vunpack.c.l.b16 %v1019
          %v1110 = vunpack.c.h.b16 %v1019
          %v1111 = vunpack.c.l.b16 %v1020
          %v1112 = vunpack.c.h.b16 %v1020
          %v1113 = vunpack.c.l.b16 %v1021
          %v1114 = vunpack.c.h.b16 %v1021
          %v1115 = vunpack.c.l.b16 %v1022
          %v1116 = vunpack.c.h.b16 %v1022
          %v1117 = vunpack.c.l.b16 %v1023
          %v1118 = vunpack.c.h.b16 %v1023
          %v1119 = vunpack.c.l.b16 %v1024
          %v1120 = vunpack.c.h.b16 %v1024
          %v1121 = vunpack.c.l.b16 %v1025
          %v1122 = vunpack.c.h.b16 %v1025
          %v1123 = vpack.c.b16 %v1063, %v1059
          %v1124 = vpack.c.b16 %v1064, %v1060
          %v1125 = vpack.c.b16 %v1065, %v1061
          %v1126 = vpack.c.b16 %v1066, %v1062
          %v1127 = vpack.c.b16 %v1071, %v1067
          %v1128 = vpack.c.b16 %v1072, %v1068
          %v1129 = vpack.c.b16 %v1073, %v1069
          %v1130 = vpack.c.b16 %v1074, %v1070
          %v1131 = vpack.c.b16 %v1079, %v1075
          %v1132 = vpack.c.b16 %v1080, %v1076
          %v1133 = vpack.c.b16 %v1081, %v1077
          %v1134 = vpack.c.b16 %v1082, %v1078
          %v1135 = vpack.c.b16 %v1087, %v1083
          %v1136 = vpack.c.b16 %v1088, %v1084
          %v1137 = vpack.c.b16 %v1089, %v1085
          %v1138 = vpack.c.b16 %v1090, %v1086
          %v1139 = vpack.c.b16 %v1095, %v1091
          %v1140 = vpack.c.b16 %v1096, %v1092
          %v1141 = vpack.c.b16 %v1097, %v1093
          %v1142 = vpack.c.b16 %v1098, %v1094
          %v1143 = vpack.c.b16 %v1103, %v1099
          %v1144 = vpack.c.b16 %v1104, %v1100
          %v1145 = vpack.c.b16 %v1105, %v1101
          %v1146 = vpack.c.b16 %v1106, %v1102
          %v1147 = vpack.c.b16 %v1111, %v1107
          %v1148 = vpack.c.b16 %v1112, %v1108
          %v1149 = vpack.c.b16 %v1113, %v1109
          %v1150 = vpack.c.b16 %v1114, %v1110
          %v1151 = vpack.c.b16 %v1119, %v1115
          %v1152 = vpack.c.b16 %v1120, %v1116
          %v1153 = vpack.c.b16 %v1121, %v1117
          %v1154 = vpack.c.b16 %v1122, %v1118
          %1187 = vmatprep.subr.bf16.mxu0 %v1124
          %1188 = vmatpush1.bf16.msra.mxu0 %v1123
          %1189 = vmatprep.subr.bf16.mxu0 %v1128
          %1190 = vmatpush1.bf16.msra.mxu0 %v1127
          %1191 = vmatprep.subr.bf16.mxu0 %v1132
          %1192 = vmatpush1.bf16.msra.mxu0 %v1131
          %1193 = vmatprep.subr.bf16.mxu0 %v1136
          %1194 = vmatpush1.bf16.msra.mxu0 %v1135
          %1195 = vmatprep.subr.bf16.mxu0 %v1140
          %1196 = vmatpush1.bf16.msra.mxu0 %v1139
          %1197 = vmatprep.subr.bf16.mxu0 %v1144
          %1198 = vmatpush1.bf16.msra.mxu0 %v1143
          %1199 = vmatprep.subr.bf16.mxu0 %v1148
          %1200 = vmatpush1.bf16.msra.mxu0 %v1147
          %1201 = vmatprep.subr.bf16.mxu0 %v1152
          %1202 = vmatpush1.bf16.msra.mxu0 %v1151
          %1203 = vmatprep.subr.bf16.mxu0 0
          %1204 = vmatpush1.bf16.msra.mxu0 0
          %1205 = vmatprep.subr.bf16.mxu0 0
          %1206 = vmatpush1.bf16.msra.mxu0 0
          %1207 = vmatprep.subr.bf16.mxu0 0
          %1208 = vmatpush1.bf16.msra.mxu0 0
          %1209 = vmatprep.subr.bf16.mxu0 0
          %1210 = vmatpush1.bf16.msra.mxu0 0
          %1211 = vmatprep.subr.bf16.mxu0 0
          %1212 = vmatpush1.bf16.msra.mxu0 0
          %1213 = vmatprep.subr.bf16.mxu0 0
          %1214 = vmatpush1.bf16.msra.mxu0 0
          %1215 = vmatprep.subr.bf16.mxu0 0
          %1216 = vmatpush1.bf16.msra.mxu0 0
          %1217 = vmatprep.subr.bf16.mxu0 0
          %1218 = vmatpush1.bf16.msra.mxu0 0
          %1219 = vmatprep.mubr.bf16.mxu0 0
          %1220 = vmatmul.mubr.bf16.gmra.mrb[0].mxu0 %v1026
          %v1221 = vpop.f32.mrb[0].mxu0
          %v1222 = vadd.f32 0.0, %v1221
          %v1223 = vpop.f32.mrb[0].mxu0
          %v1224 = vadd.f32 0.0, %v1223
          %v1225 = vpop.f32.mrb[0].mxu0
          %v1226 = vadd.f32 0.0, %v1225
          %v1227 = vpop.f32.mrb[0].mxu0
          %v1228 = vadd.f32 0.0, %v1227
          %1229 = vdwg.mxu0
          %1230 = vmatprep.subr.bf16.mxu0 %v1126
          %1231 = vmatpush1.bf16.msra.mxu0 %v1125
          %1232 = vmatprep.subr.bf16.mxu0 %v1130
          %1233 = vmatpush1.bf16.msra.mxu0 %v1129
          %1234 = vmatprep.subr.bf16.mxu0 %v1134
          %1235 = vmatpush1.bf16.msra.mxu0 %v1133
          %1236 = vmatprep.subr.bf16.mxu0 %v1138
          %1237 = vmatpush1.bf16.msra.mxu0 %v1137
          %1238 = vmatprep.subr.bf16.mxu0 %v1142
          %1239 = vmatpush1.bf16.msra.mxu0 %v1141
          %1240 = vmatprep.subr.bf16.mxu0 %v1146
          %1241 = vmatpush1.bf16.msra.mxu0 %v1145
          %1242 = vmatprep.subr.bf16.mxu0 %v1150
          %1243 = vmatpush1.bf16.msra.mxu0 %v1149
          %1244 = vmatprep.subr.bf16.mxu0 %v1154
          %1245 = vmatpush1.bf16.msra.mxu0 %v1153
          %1246 = vmatprep.subr.bf16.mxu0 0
          %1247 = vmatpush1.bf16.msra.mxu0 0
          %1248 = vmatprep.subr.bf16.mxu0 0
          %1249 = vmatpush1.bf16.msra.mxu0 0
          %1250 = vmatprep.subr.bf16.mxu0 0
          %1251 = vmatpush1.bf16.msra.mxu0 0
          %1252 = vmatprep.subr.bf16.mxu0 0
          %1253 = vmatpush1.bf16.msra.mxu0 0
          %1254 = vmatprep.subr.bf16.mxu0 0
          %1255 = vmatpush1.bf16.msra.mxu0 0
          %1256 = vmatprep.subr.bf16.mxu0 0
          %1257 = vmatpush1.bf16.msra.mxu0 0
          %1258 = vmatprep.subr.bf16.mxu0 0
          %1259 = vmatpush1.bf16.msra.mxu0 0
          %1260 = vmatprep.subr.bf16.mxu0 0
          %1261 = vmatpush1.bf16.msra.mxu0 0
          %1262 = vmatprep.mubr.bf16.mxu0 0
          %1263 = vmatmul.mubr.bf16.gmra.mrb[0].mxu0 %v1026
          %v1264 = vpop.f32.mrb[0].mxu0
          %v1265 = vadd.f32 0.0, %v1264
          %v1266 = vpop.f32.mrb[0].mxu0
          %v1267 = vadd.f32 0.0, %v1266
          %v1268 = vpop.f32.mrb[0].mxu0
          %v1269 = vadd.f32 0.0, %v1268
          %v1270 = vpop.f32.mrb[0].mxu0
          %v1271 = vadd.f32 0.0, %v1270
          %1272 = vdwg.mxu0
          %v1305 = vunpack.c.l.b16 %v961
          %v1306 = vunpack.c.h.b16 %v961
          %v1307 = vunpack.c.l.b16 %v962
          %v1308 = vunpack.c.h.b16 %v962
          %v1309 = vunpack.c.l.b16 %v963
          %v1310 = vunpack.c.h.b16 %v963
          %v1311 = vunpack.c.l.b16 %v964
          %v1312 = vunpack.c.h.b16 %v964
          %v1313 = vunpack.c.l.b16 %v965
          %v1314 = vunpack.c.h.b16 %v965
          %v1315 = vunpack.c.l.b16 %v966
          %v1316 = vunpack.c.h.b16 %v966
          %v1317 = vunpack.c.l.b16 %v967
          %v1318 = vunpack.c.h.b16 %v967
          %v1319 = vunpack.c.l.b16 %v968
          %v1320 = vunpack.c.h.b16 %v968
          %v1321 = vunpack.c.l.b16 %v969
          %v1322 = vunpack.c.h.b16 %v969
          %v1323 = vunpack.c.l.b16 %v970
          %v1324 = vunpack.c.h.b16 %v970
          %v1325 = vunpack.c.l.b16 %v971
          %v1326 = vunpack.c.h.b16 %v971
          %v1327 = vunpack.c.l.b16 %v972
          %v1328 = vunpack.c.h.b16 %v972
          %v1329 = vunpack.c.l.b16 %v973
          %v1330 = vunpack.c.h.b16 %v973
          %v1331 = vunpack.c.l.b16 %v974
          %v1332 = vunpack.c.h.b16 %v974
          %v1333 = vunpack.c.l.b16 %v975
          %v1334 = vunpack.c.h.b16 %v975
          %v1335 = vunpack.c.l.b16 %v976
          %v1336 = vunpack.c.h.b16 %v976
          %v1337 = vunpack.c.l.b16 %v977
          %v1338 = vunpack.c.h.b16 %v977
          %v1339 = vunpack.c.l.b16 %v978
          %v1340 = vunpack.c.h.b16 %v978
          %v1341 = vunpack.c.l.b16 %v979
          %v1342 = vunpack.c.h.b16 %v979
          %v1343 = vunpack.c.l.b16 %v980
          %v1344 = vunpack.c.h.b16 %v980
          %v1345 = vunpack.c.l.b16 %v981
          %v1346 = vunpack.c.h.b16 %v981
          %v1347 = vunpack.c.l.b16 %v982
          %v1348 = vunpack.c.h.b16 %v982
          %v1349 = vunpack.c.l.b16 %v983
          %v1350 = vunpack.c.h.b16 %v983
          %v1351 = vunpack.c.l.b16 %v984
          %v1352 = vunpack.c.h.b16 %v984
          %v1353 = vunpack.c.l.b16 %v985
          %v1354 = vunpack.c.h.b16 %v985
          %v1355 = vunpack.c.l.b16 %v986
          %v1356 = vunpack.c.h.b16 %v986
          %v1357 = vunpack.c.l.b16 %v987
          %v1358 = vunpack.c.h.b16 %v987
          %v1359 = vunpack.c.l.b16 %v988
          %v1360 = vunpack.c.h.b16 %v988
          %v1361 = vunpack.c.l.b16 %v989
          %v1362 = vunpack.c.h.b16 %v989
          %v1363 = vunpack.c.l.b16 %v990
          %v1364 = vunpack.c.h.b16 %v990
          %v1365 = vunpack.c.l.b16 %v991
          %v1366 = vunpack.c.h.b16 %v991
          %v1367 = vunpack.c.l.b16 %v992
          %v1368 = vunpack.c.h.b16 %v992
          %v1369 = vpack.c.b16 %v1309, %v1305
          %v1370 = vpack.c.b16 %v1310, %v1306
          %v1371 = vpack.c.b16 %v1311, %v1307
          %v1372 = vpack.c.b16 %v1312, %v1308
          %v1373 = vpack.c.b16 %v1317, %v1313
          %v1374 = vpack.c.b16 %v1318, %v1314
          %v1375 = vpack.c.b16 %v1319, %v1315
          %v1376 = vpack.c.b16 %v1320, %v1316
          %v1377 = vpack.c.b16 %v1325, %v1321
          %v1378 = vpack.c.b16 %v1326, %v1322
          %v1379 = vpack.c.b16 %v1327, %v1323
          %v1380 = vpack.c.b16 %v1328, %v1324
          %v1381 = vpack.c.b16 %v1333, %v1329
          %v1382 = vpack.c.b16 %v1334, %v1330
          %v1383 = vpack.c.b16 %v1335, %v1331
          %v1384 = vpack.c.b16 %v1336, %v1332
          %v1385 = vpack.c.b16 %v1341, %v1337
          %v1386 = vpack.c.b16 %v1342, %v1338
          %v1387 = vpack.c.b16 %v1343, %v1339
          %v1388 = vpack.c.b16 %v1344, %v1340
          %v1389 = vpack.c.b16 %v1349, %v1345
          %v1390 = vpack.c.b16 %v1350, %v1346
          %v1391 = vpack.c.b16 %v1351, %v1347
          %v1392 = vpack.c.b16 %v1352, %v1348
          %v1393 = vpack.c.b16 %v1357, %v1353
          %v1394 = vpack.c.b16 %v1358, %v1354
          %v1395 = vpack.c.b16 %v1359, %v1355
          %v1396 = vpack.c.b16 %v1360, %v1356
          %v1397 = vpack.c.b16 %v1365, %v1361
          %v1398 = vpack.c.b16 %v1366, %v1362
          %v1399 = vpack.c.b16 %v1367, %v1363
          %v1400 = vpack.c.b16 %v1368, %v1364
          %1433 = vmatprep.subr.bf16.mxu0 %v1370
          %1434 = vmatpush1.bf16.msra.mxu0 %v1369
          %1435 = vmatprep.subr.bf16.mxu0 %v1374
          %1436 = vmatpush1.bf16.msra.mxu0 %v1373
          %1437 = vmatprep.subr.bf16.mxu0 %v1378
          %1438 = vmatpush1.bf16.msra.mxu0 %v1377
          %1439 = vmatprep.subr.bf16.mxu0 %v1382
          %1440 = vmatpush1.bf16.msra.mxu0 %v1381
          %1441 = vmatprep.subr.bf16.mxu0 %v1386
          %1442 = vmatpush1.bf16.msra.mxu0 %v1385
          %1443 = vmatprep.subr.bf16.mxu0 %v1390
          %1444 = vmatpush1.bf16.msra.mxu0 %v1389
          %1445 = vmatprep.subr.bf16.mxu0 %v1394
          %1446 = vmatpush1.bf16.msra.mxu0 %v1393
          %1447 = vmatprep.subr.bf16.mxu0 %v1398
          %1448 = vmatpush1.bf16.msra.mxu0 %v1397
          %1449 = vmatprep.subr.bf16.mxu0 0
          %1450 = vmatpush1.bf16.msra.mxu0 0
          %1451 = vmatprep.subr.bf16.mxu0 0
          %1452 = vmatpush1.bf16.msra.mxu0 0
          %1453 = vmatprep.subr.bf16.mxu0 0
          %1454 = vmatpush1.bf16.msra.mxu0 0
          %1455 = vmatprep.subr.bf16.mxu0 0
          %1456 = vmatpush1.bf16.msra.mxu0 0
          %1457 = vmatprep.subr.bf16.mxu0 0
          %1458 = vmatpush1.bf16.msra.mxu0 0
          %1459 = vmatprep.subr.bf16.mxu0 0
          %1460 = vmatpush1.bf16.msra.mxu0 0
          %1461 = vmatprep.subr.bf16.mxu0 0
          %1462 = vmatpush1.bf16.msra.mxu0 0
          %1463 = vmatprep.subr.bf16.mxu0 0
          %1464 = vmatpush1.bf16.msra.mxu0 0
          %1465 = vmatprep.mubr.bf16.mxu0 0
          %1466 = vmatmul.mubr.bf16.gmra.mrb[0].mxu0 %v993
          %v1467 = vpop.f32.mrb[0].mxu0
          %v1468 = vadd.f32 %v1222, %v1467
          %v1469 = vpop.f32.mrb[0].mxu0
          %v1470 = vadd.f32 %v1224, %v1469
          %v1471 = vpop.f32.mrb[0].mxu0
          %v1472 = vadd.f32 %v1226, %v1471
          %v1473 = vpop.f32.mrb[0].mxu0
          %v1474 = vadd.f32 %v1228, %v1473
          %1475 = vdwg.mxu0
          %1476 = vmatprep.subr.bf16.mxu0 %v1372
          %1477 = vmatpush1.bf16.msra.mxu0 %v1371
          %1478 = vmatprep.subr.bf16.mxu0 %v1376
          %1479 = vmatpush1.bf16.msra.mxu0 %v1375
          %1480 = vmatprep.subr.bf16.mxu0 %v1380
          %1481 = vmatpush1.bf16.msra.mxu0 %v1379
          %1482 = vmatprep.subr.bf16.mxu0 %v1384
          %1483 = vmatpush1.bf16.msra.mxu0 %v1383
          %1484 = vmatprep.subr.bf16.mxu0 %v1388
          %1485 = vmatpush1.bf16.msra.mxu0 %v1387
          %1486 = vmatprep.subr.bf16.mxu0 %v1392
          %1487 = vmatpush1.bf16.msra.mxu0 %v1391
          %1488 = vmatprep.subr.bf16.mxu0 %v1396
          %1489 = vmatpush1.bf16.msra.mxu0 %v1395
          %1490 = vmatprep.subr.bf16.mxu0 %v1400
          %1491 = vmatpush1.bf16.msra.mxu0 %v1399
          %1492 = vmatprep.subr.bf16.mxu0 0
          %1493 = vmatpush1.bf16.msra.mxu0 0
          %1494 = vmatprep.subr.bf16.mxu0 0
          %1495 = vmatpush1.bf16.msra.mxu0 0
          %1496 = vmatprep.subr.bf16.mxu0 0
          %1497 = vmatpush1.bf16.msra.mxu0 0
          %1498 = vmatprep.subr.bf16.mxu0 0
          %1499 = vmatpush1.bf16.msra.mxu0 0
          %1500 = vmatprep.subr.bf16.mxu0 0
          %1501 = vmatpush1.bf16.msra.mxu0 0
          %1502 = vmatprep.subr.bf16.mxu0 0
          %1503 = vmatpush1.bf16.msra.mxu0 0
          %1504 = vmatprep.subr.bf16.mxu0 0
          %1505 = vmatpush1.bf16.msra.mxu0 0
          %1506 = vmatprep.subr.bf16.mxu0 0
          %1507 = vmatpush1.bf16.msra.mxu0 0
          %1508 = vmatprep.mubr.bf16.mxu0 0
          %1509 = vmatmul.mubr.bf16.gmra.mrb[0].mxu0 %v993
          %v1510 = vpop.f32.mrb[0].mxu0
          %v1511 = vadd.f32 %v1265, %v1510
          %v1512 = vpop.f32.mrb[0].mxu0
          %v1513 = vadd.f32 %v1267, %v1512
          %v1514 = vpop.f32.mrb[0].mxu0
          %v1515 = vadd.f32 %v1269, %v1514
          %v1516 = vpop.f32.mrb[0].mxu0
          %v1517 = vadd.f32 %v1271, %v1516
          %1518 = vdwg.mxu0
          %v1519 = vlaneseq
          %v1520 = vshrl.u32 %v1519, 7
          %v1521 = vsub.s32 2, %v1520
          %v1522 = vrot.slane %v880, %v1521
          %v1523 = vlaneseq
          %v1524 = vshrl.u32 %v1523, 7
          %v1525 = vsub.s32 2, %v1524
          %v1526 = vrot.slane %v881, %v1525
          %v1527 = vlaneseq
          %v1528 = vshrl.u32 %v1527, 7
          %v1529 = vsub.s32 2, %v1528
          %v1530 = vrot.slane %v882, %v1529
          %v1531 = vlaneseq
          %v1532 = vshrl.u32 %v1531, 7
          %v1533 = vsub.s32 2, %v1532
          %v1534 = vrot.slane %v883, %v1533
          %v1535 = vadd.f32 %v1468, %v1522
          %v1536 = vadd.f32 %v1470, %v1526
          %v1537 = vadd.f32 %v1511, %v1530
          %v1538 = vadd.f32 %v1513, %v1534
          %v1539 = vadd.f32 %v1472, %v1522
          %v1540 = vadd.f32 %v1474, %v1526
          %v1541 = vadd.f32 %v1515, %v1530
          %v1542 = vadd.f32 %v1517, %v1534
          %v1543 = vadd.f32 %v1535, %v1539
          %v1544 = vrot.slane %v1543, 4
          %v1545 = vadd.f32 %v1543, %v1544
          %v1546 = vrot.slane %v1545, 2
          %v1547 = vadd.f32 %v1545, %v1546
          %v1548 = vrot.slane %v1547, 1
          %v1549 = vadd.f32 %v1547, %v1548
          %v1550 = vadd.f32 %v1536, %v1540
          %v1551 = vrot.slane %v1550, 4
          %v1552 = vadd.f32 %v1550, %v1551
          %v1553 = vrot.slane %v1552, 2
          %v1554 = vadd.f32 %v1552, %v1553
          %v1555 = vrot.slane %v1554, 1
          %v1556 = vadd.f32 %v1554, %v1555
          %v1557 = vadd.f32 %v1537, %v1541
          %v1558 = vrot.slane %v1557, 4
          %v1559 = vadd.f32 %v1557, %v1558
          %v1560 = vrot.slane %v1559, 2
          %v1561 = vadd.f32 %v1559, %v1560
          %v1562 = vrot.slane %v1561, 1
          %v1563 = vadd.f32 %v1561, %v1562
          %v1564 = vadd.f32 %v1538, %v1542
          %v1565 = vrot.slane %v1564, 4
          %v1566 = vadd.f32 %v1564, %v1565
          %v1567 = vrot.slane %v1566, 2
          %v1568 = vadd.f32 %v1566, %v1567
          %v1569 = vrot.slane %v1568, 1
          %v1570 = vadd.f32 %v1568, %v1569
          %v1571 = vmul.f32 %v1549, %v762
          %v1572 = vmul.f32 %v1556, %v762
          %v1573 = vmul.f32 %v1563, %v762
          %v1574 = vmul.f32 %v1570, %v762
          %v1575 = vsub.f32 %v1535, %v1571
          %v1576 = vsub.f32 %v1536, %v1572
          %v1577 = vsub.f32 %v1537, %v1573
          %v1578 = vsub.f32 %v1538, %v1574
          %v1579 = vsub.f32 %v1539, %v1571
          %v1580 = vsub.f32 %v1540, %v1572
          %v1581 = vsub.f32 %v1541, %v1573
          %v1582 = vsub.f32 %v1542, %v1574
          %v1583 = vmul.f32 %v1575, %v1575
          %v1584 = vmul.f32 %v1576, %v1576
          %v1585 = vmul.f32 %v1577, %v1577
          %v1586 = vmul.f32 %v1578, %v1578
          %v1587 = vmul.f32 %v1579, %v1579
          %v1588 = vmul.f32 %v1580, %v1580
          %v1589 = vmul.f32 %v1581, %v1581
          %v1590 = vmul.f32 %v1582, %v1582
          %v1591 = vadd.f32 %v1583, %v1587
          %v1592 = vrot.slane %v1591, 4
          %v1593 = vadd.f32 %v1591, %v1592
          %v1594 = vrot.slane %v1593, 2
          %v1595 = vadd.f32 %v1593, %v1594
          %v1596 = vrot.slane %v1595, 1
          %v1597 = vadd.f32 %v1595, %v1596
          %v1598 = vadd.f32 %v1584, %v1588
          %v1599 = vrot.slane %v1598, 4
          %v1600 = vadd.f32 %v1598, %v1599
          %v1601 = vrot.slane %v1600, 2
          %v1602 = vadd.f32 %v1600, %v1601
          %v1603 = vrot.slane %v1602, 1
          %v1604 = vadd.f32 %v1602, %v1603
          %v1605 = vadd.f32 %v1585, %v1589
          %v1606 = vrot.slane %v1605, 4
          %v1607 = vadd.f32 %v1605, %v1606
          %v1608 = vrot.slane %v1607, 2
          %v1609 = vadd.f32 %v1607, %v1608
          %v1610 = vrot.slane %v1609, 1
          %v1611 = vadd.f32 %v1609, %v1610
          %v1612 = vadd.f32 %v1586, %v1590
          %v1613 = vrot.slane %v1612, 4
          %v1614 = vadd.f32 %v1612, %v1613
          %v1615 = vrot.slane %v1614, 2
          %v1616 = vadd.f32 %v1614, %v1615
          %v1617 = vrot.slane %v1616, 1
          %v1618 = vadd.f32 %v1616, %v1617
          %v1619 = vmul.f32 %v1597, %v762
          %v1620 = vmul.f32 %v1604, %v762
          %v1621 = vmul.f32 %v1611, %v762
          %v1622 = vmul.f32 %v1618, %v762
          %v1623 = vadd.f32 %v1619, 1e-05
          %v1624 = vadd.f32 %v1620, 1e-05
          %v1625 = vadd.f32 %v1621, 1e-05
          %v1626 = vadd.f32 %v1622, 1e-05
          %v1627 = vrsqrt.pop %v1623
          %v1628 = vrsqrt.pop %v1624
          %v1629 = vrsqrt.pop %v1625
          %v1630 = vrsqrt.pop %v1626
          %v1631 = vmul.f32 %v1575, %v1627
          %v1632 = vmul.f32 %v1576, %v1628
          %v1633 = vmul.f32 %v1577, %v1629
          %v1634 = vmul.f32 %v1578, %v1630
          %v1635 = vmul.f32 %v1579, %v1627
          %v1636 = vmul.f32 %v1580, %v1628
          %v1637 = vmul.f32 %v1581, %v1629
          %v1638 = vmul.f32 %v1582, %v1630
          %v1639 = vlaneseq
          %v1640 = vshrl.u32 %v1639, 7
          %v1641 = vsub.s32 3, %v1640
          %v1642 = vrot.slane %v880, %v1641
          %v1643 = vlaneseq
          %v1644 = vshrl.u32 %v1643, 7
          %v1645 = vsub.s32 3, %v1644
          %v1646 = vrot.slane %v881, %v1645
          %v1647 = vlaneseq
          %v1648 = vshrl.u32 %v1647, 7
          %v1649 = vsub.s32 3, %v1648
          %v1650 = vrot.slane %v882, %v1649
          %v1651 = vlaneseq
          %v1652 = vshrl.u32 %v1651, 7
          %v1653 = vsub.s32 3, %v1652
          %v1654 = vrot.slane %v883, %v1653
          %v1655 = vmul.f32 %v1631, %v1642
          %v1656 = vmul.f32 %v1632, %v1646
          %v1657 = vmul.f32 %v1633, %v1650
          %v1658 = vmul.f32 %v1634, %v1654
          %v1659 = vmul.f32 %v1635, %v1642
          %v1660 = vmul.f32 %v1636, %v1646
          %v1661 = vmul.f32 %v1637, %v1650
          %v1662 = vmul.f32 %v1638, %v1654
          %v1663 = vlaneseq
          %v1664 = vshrl.u32 %v1663, 7
          %v1665 = vsub.s32 4, %v1664
          %v1666 = vrot.slane %v880, %v1665
          %v1667 = vlaneseq
          %v1668 = vshrl.u32 %v1667, 7
          %v1669 = vsub.s32 4, %v1668
          %v1670 = vrot.slane %v881, %v1669
          %v1671 = vlaneseq
          %v1672 = vshrl.u32 %v1671, 7
          %v1673 = vsub.s32 4, %v1672
          %v1674 = vrot.slane %v882, %v1673
          %v1675 = vlaneseq
          %v1676 = vshrl.u32 %v1675, 7
          %v1677 = vsub.s32 4, %v1676
          %v1678 = vrot.slane %v883, %v1677
          %v1679 = vadd.f32 %v1655, %v1666
          %v1680 = vadd.f32 %v1656, %v1670
          %v1681 = vadd.f32 %v1657, %v1674
          %v1682 = vadd.f32 %v1658, %v1678
          %v1683 = vadd.f32 %v1659, %v1666
          %v1684 = vadd.f32 %v1660, %v1670
          %v1685 = vadd.f32 %v1661, %v1674
          %v1686 = vadd.f32 %v1662, %v1678
          %v1687 = vtanh.pop %v1679
          %v1688 = vtanh.pop %v1680
          %v1689 = vtanh.pop %v1681
          %v1690 = vtanh.pop %v1682
          %v1691 = vtanh.pop %v1683
          %v1692 = vtanh.pop %v1684
          %v1693 = vtanh.pop %v1685
          %v1694 = vtanh.pop %v1686
          %v1695 = vld [vmem:[#allocation14] sm:$0xf]
          %v1696 = vld [vmem:[#allocation14 + $0x4] sm:$0xf]
          %v1697 = vld [vmem:[#allocation14 + $0x8] sm:$0xf]
          %v1698 = vld [vmem:[#allocation14 + $0xc] sm:$0xf]
          %v1699 = vld [vmem:[#allocation14 + $0x10] sm:$0xf]
          %v1700 = vld [vmem:[#allocation14 + $0x14] sm:$0xf]
          %v1701 = vld [vmem:[#allocation14 + $0x18] sm:$0xf]
          %v1702 = vld [vmem:[#allocation14 + $0x1c] sm:$0xf]
          %v1703 = vld [vmem:[#allocation14 + $0x20] sm:$0xf]
          %v1704 = vld [vmem:[#allocation14 + $0x24] sm:$0xf]
          %v1705 = vld [vmem:[#allocation14 + $0x28] sm:$0xf]
          %v1706 = vld [vmem:[#allocation14 + $0x2c] sm:$0xf]
          %v1707 = vld [vmem:[#allocation14 + $0x30] sm:$0xf]
          %v1708 = vld [vmem:[#allocation14 + $0x34] sm:$0xf]
          %v1709 = vld [vmem:[#allocation14 + $0x38] sm:$0xf]
          %v1710 = vld [vmem:[#allocation14 + $0x3c] sm:$0xf]
          %v1711 = vld [vmem:[#allocation14 + $0x40] sm:$0xf]
          %v1712 = vld [vmem:[#allocation14 + $0x44] sm:$0xf]
          %v1713 = vld [vmem:[#allocation14 + $0x48] sm:$0xf]
          %v1714 = vld [vmem:[#allocation14 + $0x4c] sm:$0xf]
          %v1715 = vld [vmem:[#allocation14 + $0x50] sm:$0xf]
          %v1716 = vld [vmem:[#allocation14 + $0x54] sm:$0xf]
          %v1717 = vld [vmem:[#allocation14 + $0x58] sm:$0xf]
          %v1718 = vld [vmem:[#allocation14 + $0x5c] sm:$0xf]
          %v1719 = vld [vmem:[#allocation14 + $0x60] sm:$0xf]
          %v1720 = vld [vmem:[#allocation14 + $0x64] sm:$0xf]
          %v1721 = vld [vmem:[#allocation14 + $0x68] sm:$0xf]
          %v1722 = vld [vmem:[#allocation14 + $0x6c] sm:$0xf]
          %v1723 = vld [vmem:[#allocation14 + $0x70] sm:$0xf]
          %v1724 = vld [vmem:[#allocation14 + $0x74] sm:$0xf]
          %v1725 = vld [vmem:[#allocation14 + $0x78] sm:$0xf]
          %v1726 = vld [vmem:[#allocation14 + $0x7c] sm:$0xf]
          %v1727 = vld [vmem:[#allocation14 + $0x80] sm:$0xf]
          %v1728 = vld [vmem:[#allocation14 + $0x84] sm:$0xf]
          %v1729 = vld [vmem:[#allocation14 + $0x88] sm:$0xf]
          %v1730 = vld [vmem:[#allocation14 + $0x8c] sm:$0xf]
          %v1731 = vld [vmem:[#allocation14 + $0x90] sm:$0xf]
          %v1732 = vld [vmem:[#allocation14 + $0x94] sm:$0xf]
          %v1733 = vld [vmem:[#allocation14 + $0x98] sm:$0xf]
          %v1734 = vld [vmem:[#allocation14 + $0x9c] sm:$0xf]
          %v1735 = vld [vmem:[#allocation14 + $0xa0] sm:$0xf]
          %v1736 = vld [vmem:[#allocation14 + $0xa4] sm:$0xf]
          %v1737 = vld [vmem:[#allocation14 + $0xa8] sm:$0xf]
          %v1738 = vld [vmem:[#allocation14 + $0xac] sm:$0xf]
          %v1739 = vld [vmem:[#allocation14 + $0xb0] sm:$0xf]
          %v1740 = vld [vmem:[#allocation14 + $0xb4] sm:$0xf]
          %v1741 = vld [vmem:[#allocation14 + $0xb8] sm:$0xf]
          %v1742 = vld [vmem:[#allocation14 + $0xbc] sm:$0xf]
          %v1743 = vld [vmem:[#allocation14 + $0xc0] sm:$0xf]
          %v1744 = vld [vmem:[#allocation14 + $0xc4] sm:$0xf]
          %v1745 = vld [vmem:[#allocation14 + $0xc8] sm:$0xf]
          %v1746 = vld [vmem:[#allocation14 + $0xcc] sm:$0xf]
          %v1747 = vld [vmem:[#allocation14 + $0xd0] sm:$0xf]
          %v1748 = vld [vmem:[#allocation14 + $0xd4] sm:$0xf]
          %v1749 = vld [vmem:[#allocation14 + $0xd8] sm:$0xf]
          %v1750 = vld [vmem:[#allocation14 + $0xdc] sm:$0xf]
          %v1751 = vld [vmem:[#allocation14 + $0xe0] sm:$0xf]
          %v1752 = vld [vmem:[#allocation14 + $0xe4] sm:$0xf]
          %v1753 = vld [vmem:[#allocation14 + $0xe8] sm:$0xf]
          %v1754 = vld [vmem:[#allocation14 + $0xec] sm:$0xf]
          %v1755 = vld [vmem:[#allocation14 + $0xf0] sm:$0xf]
          %v1756 = vld [vmem:[#allocation14 + $0xf4] sm:$0xf]
          %v1757 = vld [vmem:[#allocation14 + $0xf8] sm:$0xf]
          %v1758 = vld [vmem:[#allocation14 + $0xfc] sm:$0xf]
          %v1759 = vpack.c.bf16 %v1691, %v1687
          %v1760 = vpack.c.bf16 %v1692, %v1688
          %v1761 = vpack.c.bf16 %v1693, %v1689
          %v1762 = vpack.c.bf16 %v1694, %v1690
          %v1763 = vlaneseq
          %v1764 = vshrl.u32 %v1763, 7
          %v1765 = vsub.s32 5, %v1764
          %v1766 = vrot.slane %v880, %v1765
          %v1831 = vunpack.c.l.b16 %v1695
          %v1832 = vunpack.c.l.b16 %v1696
          %v1833 = vunpack.c.l.b16 %v1697
          %v1834 = vunpack.c.l.b16 %v1698
          %v1835 = vunpack.c.l.b16 %v1699
          %v1836 = vunpack.c.l.b16 %v1700
          %v1837 = vunpack.c.l.b16 %v1701
          %v1838 = vunpack.c.l.b16 %v1702
          %v1839 = vunpack.c.l.b16 %v1703
          %v1840 = vunpack.c.l.b16 %v1704
          %v1841 = vunpack.c.l.b16 %v1705
          %v1842 = vunpack.c.l.b16 %v1706
          %v1843 = vunpack.c.l.b16 %v1707
          %v1844 = vunpack.c.l.b16 %v1708
          %v1845 = vunpack.c.l.b16 %v1709
          %v1846 = vunpack.c.l.b16 %v1710
          %v1847 = vunpack.c.l.b16 %v1711
          %v1848 = vunpack.c.l.b16 %v1712
          %v1849 = vunpack.c.l.b16 %v1713
          %v1850 = vunpack.c.l.b16 %v1714
          %v1851 = vunpack.c.l.b16 %v1715
          %v1852 = vunpack.c.l.b16 %v1716
          %v1853 = vunpack.c.l.b16 %v1717
          %v1854 = vunpack.c.l.b16 %v1718
          %v1855 = vunpack.c.l.b16 %v1719
          %v1856 = vunpack.c.l.b16 %v1720
          %v1857 = vunpack.c.l.b16 %v1721
          %v1858 = vunpack.c.l.b16 %v1722
          %v1859 = vunpack.c.l.b16 %v1723
          %v1860 = vunpack.c.l.b16 %v1724
          %v1861 = vunpack.c.l.b16 %v1725
          %v1862 = vunpack.c.l.b16 %v1726
          %v1863 = vunpack.c.l.b16 %v1727
          %v1864 = vunpack.c.l.b16 %v1728
          %v1865 = vunpack.c.l.b16 %v1729
          %v1866 = vunpack.c.l.b16 %v1730
          %v1867 = vunpack.c.l.b16 %v1731
          %v1868 = vunpack.c.l.b16 %v1732
          %v1869 = vunpack.c.l.b16 %v1733
          %v1870 = vunpack.c.l.b16 %v1734
          %v1871 = vunpack.c.l.b16 %v1735
          %v1872 = vunpack.c.l.b16 %v1736
          %v1873 = vunpack.c.l.b16 %v1737
          %v1874 = vunpack.c.l.b16 %v1738
          %v1875 = vunpack.c.l.b16 %v1739
          %v1876 = vunpack.c.l.b16 %v1740
          %v1877 = vunpack.c.l.b16 %v1741
          %v1878 = vunpack.c.l.b16 %v1742
          %v1879 = vunpack.c.l.b16 %v1743
          %v1880 = vunpack.c.l.b16 %v1744
          %v1881 = vunpack.c.l.b16 %v1745
          %v1882 = vunpack.c.l.b16 %v1746
          %v1883 = vunpack.c.l.b16 %v1747
          %v1884 = vunpack.c.l.b16 %v1748
          %v1885 = vunpack.c.l.b16 %v1749
          %v1886 = vunpack.c.l.b16 %v1750
          %v1887 = vunpack.c.l.b16 %v1751
          %v1888 = vunpack.c.l.b16 %v1752
          %v1889 = vunpack.c.l.b16 %v1753
          %v1890 = vunpack.c.l.b16 %v1754
          %v1891 = vunpack.c.l.b16 %v1755
          %v1892 = vunpack.c.l.b16 %v1756
          %v1893 = vunpack.c.l.b16 %v1757
          %v1894 = vunpack.c.l.b16 %v1758
          %v1895 = vpack.c.b16 %v1832, %v1831
          %v1896 = vpack.c.b16 %v1834, %v1833
          %v1897 = vpack.c.b16 %v1836, %v1835
          %v1898 = vpack.c.b16 %v1838, %v1837
          %v1899 = vpack.c.b16 %v1840, %v1839
          %v1900 = vpack.c.b16 %v1842, %v1841
          %v1901 = vpack.c.b16 %v1844, %v1843
          %v1902 = vpack.c.b16 %v1846, %v1845
          %v1903 = vpack.c.b16 %v1848, %v1847
          %v1904 = vpack.c.b16 %v1850, %v1849
          %v1905 = vpack.c.b16 %v1852, %v1851
          %v1906 = vpack.c.b16 %v1854, %v1853
          %v1907 = vpack.c.b16 %v1856, %v1855
          %v1908 = vpack.c.b16 %v1858, %v1857
          %v1909 = vpack.c.b16 %v1860, %v1859
          %v1910 = vpack.c.b16 %v1862, %v1861
          %v1911 = vpack.c.b16 %v1864, %v1863
          %v1912 = vpack.c.b16 %v1866, %v1865
          %v1913 = vpack.c.b16 %v1868, %v1867
          %v1914 = vpack.c.b16 %v1870, %v1869
          %v1915 = vpack.c.b16 %v1872, %v1871
          %v1916 = vpack.c.b16 %v1874, %v1873
          %v1917 = vpack.c.b16 %v1876, %v1875
          %v1918 = vpack.c.b16 %v1878, %v1877
          %v1919 = vpack.c.b16 %v1880, %v1879
          %v1920 = vpack.c.b16 %v1882, %v1881
          %v1921 = vpack.c.b16 %v1884, %v1883
          %v1922 = vpack.c.b16 %v1886, %v1885
          %v1923 = vpack.c.b16 %v1888, %v1887
          %v1924 = vpack.c.b16 %v1890, %v1889
          %v1925 = vpack.c.b16 %v1892, %v1891
          %v1926 = vpack.c.b16 %v1894, %v1893
          %1959 = vmatprep.subr.bf16.mxu0 0
          %1960 = vmatpush1.bf16.msra.mxu0 %v1895
          %1961 = vmatprep.subr.bf16.mxu0 0
          %1962 = vmatpush1.bf16.msra.mxu0 %v1896
          %1963 = vmatprep.subr.bf16.mxu0 0
          %1964 = vmatpush1.bf16.msra.mxu0 %v1897
          %1965 = vmatprep.subr.bf16.mxu0 0
          %1966 = vmatpush1.bf16.msra.mxu0 %v1898
          %1967 = vmatprep.subr.bf16.mxu0 0
          %1968 = vmatpush1.bf16.msra.mxu0 %v1899
          %1969 = vmatprep.subr.bf16.mxu0 0
          %1970 = vmatpush1.bf16.msra.mxu0 %v1900
          %1971 = vmatprep.subr.bf16.mxu0 0
          %1972 = vmatpush1.bf16.msra.mxu0 %v1901
          %1973 = vmatprep.subr.bf16.mxu0 0
          %1974 = vmatpush1.bf16.msra.mxu0 %v1902
          %1975 = vmatprep.subr.bf16.mxu0 0
          %1976 = vmatpush1.bf16.msra.mxu0 %v1903
          %1977 = vmatprep.subr.bf16.mxu0 0
          %1978 = vmatpush1.bf16.msra.mxu0 %v1904
          %1979 = vmatprep.subr.bf16.mxu0 0
          %1980 = vmatpush1.bf16.msra.mxu0 %v1905
          %1981 = vmatprep.subr.bf16.mxu0 0
          %1982 = vmatpush1.bf16.msra.mxu0 %v1906
          %1983 = vmatprep.subr.bf16.mxu0 0
          %1984 = vmatpush1.bf16.msra.mxu0 %v1907
          %1985 = vmatprep.subr.bf16.mxu0 0
          %1986 = vmatpush1.bf16.msra.mxu0 %v1908
          %1987 = vmatprep.subr.bf16.mxu0 0
          %1988 = vmatpush1.bf16.msra.mxu0 %v1909
          %1989 = vmatprep.subr.bf16.mxu0 0
          %1990 = vmatpush1.bf16.msra.mxu0 %v1910
          %1991 = vmatprep.mubr.bf16.mxu0 %v1760
          %1992 = vmatmul.mubr.bf16.gmra.mrb[0].mxu0 %v1759
          %v1993 = vpop.f32.mrb[0].mxu0
          %v1994 = vadd.f32 %v1766, %v1993
          %v1995 = vpop.f32.mrb[0].mxu0
          %v1996 = vpop.f32.mrb[0].mxu0
          %v1997 = vadd.f32 %v1766, %v1996
          %v1998 = vpop.f32.mrb[0].mxu0
          %1999 = vdwg.mxu0
          %2000 = vmatprep.subr.bf16.mxu0 0
          %2001 = vmatpush1.bf16.msra.mxu0 %v1911
          %2002 = vmatprep.subr.bf16.mxu0 0
          %2003 = vmatpush1.bf16.msra.mxu0 %v1912
          %2004 = vmatprep.subr.bf16.mxu0 0
          %2005 = vmatpush1.bf16.msra.mxu0 %v1913
          %2006 = vmatprep.subr.bf16.mxu0 0
          %2007 = vmatpush1.bf16.msra.mxu0 %v1914
          %2008 = vmatprep.subr.bf16.mxu0 0
          %2009 = vmatpush1.bf16.msra.mxu0 %v1915
          %2010 = vmatprep.subr.bf16.mxu0 0
          %2011 = vmatpush1.bf16.msra.mxu0 %v1916
          %2012 = vmatprep.subr.bf16.mxu0 0
          %2013 = vmatpush1.bf16.msra.mxu0 %v1917
          %2014 = vmatprep.subr.bf16.mxu0 0
          %2015 = vmatpush1.bf16.msra.mxu0 %v1918
          %2016 = vmatprep.subr.bf16.mxu0 0
          %2017 = vmatpush1.bf16.msra.mxu0 %v1919
          %2018 = vmatprep.subr.bf16.mxu0 0
          %2019 = vmatpush1.bf16.msra.mxu0 %v1920
          %2020 = vmatprep.subr.bf16.mxu0 0
          %2021 = vmatpush1.bf16.msra.mxu0 %v1921
          %2022 = vmatprep.subr.bf16.mxu0 0
          %2023 = vmatpush1.bf16.msra.mxu0 %v1922
          %2024 = vmatprep.subr.bf16.mxu0 0
          %2025 = vmatpush1.bf16.msra.mxu0 %v1923
          %2026 = vmatprep.subr.bf16.mxu0 0
          %2027 = vmatpush1.bf16.msra.mxu0 %v1924
          %2028 = vmatprep.subr.bf16.mxu0 0
          %2029 = vmatpush1.bf16.msra.mxu0 %v1925
          %2030 = vmatprep.subr.bf16.mxu0 0
          %2031 = vmatpush1.bf16.msra.mxu0 %v1926
          %2032 = vmatprep.mubr.bf16.mxu0 %v1762
          %2033 = vmatmul.mubr.bf16.gmra.mrb[0].mxu0 %v1761
          %v2034 = vpop.f32.mrb[0].mxu0
          %v2035 = vadd.f32 %v1994, %v2034
          %v2036 = vpop.f32.mrb[0].mxu0
          %v2037 = vpop.f32.mrb[0].mxu0
          %v2038 = vadd.f32 %v1997, %v2037
          %v2039 = vpop.f32.mrb[0].mxu0
          %2040 = vdwg.mxu0
          %2041 = vst [vmem:[#allocation15] sm:$0xff] %v2035
          %2042 = vst [vmem:[#allocation15 + $0x8] sm:$0xff] %v2038
        $region92: #{tpu_custom_call.1} parent=47 // pred_fallthru
          _
        // Predicated region
        $region93: #{tpu_custom_call.1} parent=47 // pred_check
          %p2043 = pneg %p231
        $region94: #{tpu_custom_call.1} parent=47 // pred_check_branch
          %2045 = sbr.rel (%p2043) target = $region96
        $region95: #{tpu_custom_call.1} parent=47 // pred_region
          %s2047 = ssub.s32 256, 256
          %2048 = vsyncadd [#allocation5], %s2047
          %s2049 = sshll.u32 [#allocation15], 4
          %s2050 = int_to_ptr.vmem [resolvable:$true] %s2049
          %2055 = dma.vmem_to_hbm [thread:$0]  %s2050, 256, %s7, [#allocation5], 128, 128, 8
        $region96: #{tpu_custom_call.1} parent=47 // pred_fallthru
          _
        // Predicated region
        $region97: #{tpu_custom_call.1} parent=47 // pred_check
          %p2056 = pneg %p231
        $region98: #{tpu_custom_call.1} parent=47 // pred_check_branch
          %2058 = sbr.rel (%p2056) target = $region100
        $region99: #{tpu_custom_call.1} parent=47 // pred_region
          %2059 = dma.done [#allocation5], 256
        $region100: #{tpu_custom_call.1} parent=47 // pred_fallthru
          _
      $region48: #{tpu_custom_call.1} parent=5 // pred_fallthru
        _
      %p2060 = scmp.le.s32.totalorder 2, %s24
      // Predicated region
      $region101: #{tpu_custom_call.1} parent=5 // pred_check
        %p2061 = pneg %p2060
      $region102: #{tpu_custom_call.1} parent=5 // pred_check_branch
        %2063 = sbr.rel (%p2061) target = $region104
      $region103: #{tpu_custom_call.1} parent=5 // pred_region
        %s2064 = ssub.s32 %s24, 2
      $region104: #{tpu_custom_call.1} parent=5 // pred_fallthru
        _
    $region6: #{tpu_custom_call.1} parent=1 // loop_footer
      %s28 = sadd.s32 1, %s24
    $region7: #{tpu_custom_call.1} parent=1 // loop_footer_branch
      %23 = sbr.rel target = $region3
    $region8: #{tpu_custom_call.1} parent=1 // loop_exit
      _
    %2065 = vsyncpa [#allocation4], 1
    %s2066 = scalar_lea.sflag [#allocation4], 1
    %2067 = vsyncpa %s2066, 1
    %2068 = vsyncpa [#allocation7], 1
    %s2069 = scalar_lea.sflag [#allocation7], 1
    %2070 = vsyncpa %s2069, 1
    %2071 = vsyncpa [#allocation10], 1
    %s2072 = scalar_lea.sflag [#allocation10], 1
    %2073 = vsyncpa %s2072, 1
    %2074 = vsyncpa [#allocation13], 1
    %2075 = vsyncpa [#allocation5], 1
    %s2076 = scalar_lea.sflag [#allocation5], 1
    %2077 = vsyncpa %s2076, 1

</llo_original>
